<compile_context>
chip_gen: v7x
topology: tpu7x:2x2x1
jax: 0.10.0
libtpu: 0.0.40
codegen_flags: <defaults>
</compile_context>

<pallas_src>
import jax
import jax.numpy as jnp
import numpy as np
from jax import lax
from jax.experimental import pallas as pl
from jax.experimental.pallas import tpu as pltpu

# ---- Synthetic small config consistent with the module ----
B = 2            # batch
T = 5            # fixed window of 5 word positions (last dim of packed_ids)
L = 8            # char_max_len  -> components = 1 + L
DW = 32          # word embedding dim
C = 16           # char embedding dim
F = 8            # char CNN filters
K = 3            # char CNN window size (padding = 1)
H = 32           # hidden units
NT = 10          # number of tags
V_WORD = 64      # word vocab
V_CHAR = 21      # char vocab (len(char_to_idx)+1), index 0 = PAD_CHAR
PAD_WORD = 0     # padding word index
D = DW + F       # combined per-position feature dim

LP = L + 2       # conv-padded char length
NW = T * B       # word index rows (t-major, b-minor)
NC = LP * T * B  # padded char index rows (l-major, then t, then b)
COFF = 16        # char-index region offset inside the packed ids array (8-sublane aligned)
NB = F + H + NT  # packed bias width

_HIGH = lax.Precision.HIGHEST  # reference (ground truth) only


def _fused_kernel(ids_ref, wtbl_ref, ctbl_ref, wc_ref, w1_ref, bias_ref, w2_ref, out_ref):
    """Fully fused forward: embeddings (one-hot matmuls) + char CNN + max-pool + MLP classifier."""
    bias = bias_ref[...]                                   # (1, F+H+NT)
    bc = bias[:, 0:F]                                      # conv bias
    b1 = bias[:, F:F + H]                                  # hidden bias
    b2 = bias[:, F + H:F + H + NT]                         # output bias

    # --- embedding gathers as one-hot matmuls (sentinel index >= vocab -> exact zero row) ---
    wid = ids_ref[0:NW, :]                                 # (NW, 1) int32, t-major rows
    w_oh = (lax.broadcasted_iota(jnp.int32, (NW, V_WORD), 1) == wid).astype(jnp.float32)
    wembeds = jnp.dot(w_oh, wtbl_ref[...], preferred_element_type=jnp.float32)   # (NW, DW)

    cid = ids_ref[COFF:COFF + NC, :]                       # (NC, 1) int32, (lp, t, b) ordering
    c_oh = (lax.broadcasted_iota(jnp.int32, (NC, V_CHAR), 1) == cid).astype(jnp.float32)
    cembeds = jnp.dot(c_oh, ctbl_ref[...], preferred_element_type=jnp.float32)   # (NC, C)
    # TODO(synk): nn.Dropout layers omitted (eval-mode identity; no RNG dropout in kernel).

    # --- char CNN as ONE im2col matmul, then max-pool over char length L ---
    ce = cembeds.reshape(LP, T * B, C)                     # leading split, lane dim unchanged
    xcol = jnp.concatenate(
        [ce[k:k + L].reshape(L * T * B, C) for k in range(K)], axis=-1)           # (L*T*B, K*C)
    conv = jnp.dot(xcol, wc_ref[...], preferred_element_type=jnp.float32)         # (L*T*B, F)
    pooled = jnp.max(conv.reshape(L, T * B, F), axis=0) + bc                      # (T*B, F)

    # --- classifier: Linear(T*D -> H) as one batched contraction over the T positions ---
    comb = jnp.concatenate([wembeds, pooled], axis=-1)     # (T*B, D), per-row [word | char]
    part = jnp.einsum("tbd,tdh->tbh", comb.reshape(T, B, D), w1_ref[...],
                      preferred_element_type=jnp.float32)                          # (T, B, H)
    z = jnp.tanh(jnp.sum(part, axis=0) + b1)                                       # (B, H)
    out_ref[...] = jnp.dot(z, w2_ref[...], preferred_element_type=jnp.float32) + b2


def mlp_tagger_char_cnn_forward(packed_ids, params):
    words_ids = packed_ids[:, 0, :]                        # (B, T)
    char_rows = packed_ids[:, 1:, :]                       # (B, L, T)

    # Only integer index-layout prep stays outside the kernel (tiny int32 arrays).
    wid = jnp.transpose(words_ids, (1, 0)).reshape(NW, 1)                  # t-major word rows
    cid3 = jnp.transpose(char_rows, (1, 2, 0))                             # (L, T, B)
    cid3 = jnp.pad(cid3, ((1, 1), (0, 0), (0, 0)), constant_values=V_CHAR)  # sentinel = zero pad
    ids = jnp.concatenate(
        [wid, jnp.zeros((COFF - NW, 1), jnp.int32), cid3.reshape(NC, 1)],
        axis=0).astype(jnp.int32)                                          # (COFF + NC, 1)

    wc = params["conv_w"].reshape(K * C, F)                # im2col weight, tap-major rows
    w1_r = params["w1"].reshape(T, D, H)                   # per-position [word | char] blocks
    bias = jnp.concatenate(
        [params["conv_b"], params["b1"], params["b2"]]).reshape(1, NB)

    return pl.pallas_call(
        _fused_kernel,
        out_shape=jax.ShapeDtypeStruct((B, NT), jnp.float32),
        in_specs=[pl.BlockSpec(memory_space=pltpu.MemorySpace.VMEM)] * 7,
        out_specs=pl.BlockSpec(memory_space=pltpu.MemorySpace.VMEM),
    )(ids, params["word_emb"], params["char_emb"], wc, w1_r, bias, params["w2"])


def reference_forward(packed_ids, params):
    """Pure-JAX mirror of the PyTorch forward (eval mode), HIGHEST precision ground truth."""
    words_ids = packed_ids[:, 0, :]
    char_rows = packed_ids[:, 1:, :]
    char_inputs = jnp.transpose(char_rows, (0, 2, 1))            # (B, T, L)
    word_embeds = params["word_emb"][words_ids]                  # (B, T, DW)
    chars_flat = char_inputs.reshape(B * T, L)
    ce = params["char_emb"][chars_flat]                          # (B*T, L, C)
    ce_ncw = jnp.transpose(ce, (0, 2, 1))                        # (B*T, C, L) -- torch NCW
    w_torch = jnp.transpose(params["conv_w"], (2, 1, 0))         # (F, C, K)
    cnn = lax.conv_general_dilated(ce_ncw, w_torch, (1,), [(1, 1)],
                                   dimension_numbers=("NCH", "OIH", "NCH"),
                                   precision=_HIGH)
    cnn = cnn + params["conv_b"][None, :, None]                  # (B*T, F, L)
    pooled = jnp.max(cnn, axis=-1)                               # (B*T, F)
    char_features = pooled.reshape(B, T, F)
    combined = jnp.concatenate([word_embeds, char_features], axis=2)
    flat = combined.reshape(B, T * D)
    z = jnp.tanh(jnp.dot(flat, params["w1"], precision=_HIGH) + params["b1"])
    return jnp.dot(z, params["w2"], precision=_HIGH) + params["b2"]


def init_params(key):
    ks = jax.random.split(key, 8)
    word_emb = 0.1 * jax.random.normal(ks[0], (V_WORD, DW), jnp.float32)
    word_emb = word_emb.at[PAD_WORD].set(0.0)                    # padding_idx row
    char_emb = 0.1 * jax.random.normal(ks[1], (V_CHAR, C), jnp.float32)
    char_emb = char_emb.at[0].set(0.0)                           # padding_idx=0
    conv_w = 0.1 * jax.random.normal(ks[2], (K, C, F), jnp.float32)
    conv_b = 0.1 * jax.random.normal(ks[3], (F,), jnp.float32)
    w1 = 0.1 * jax.random.normal(ks[4], (T * D, H), jnp.float32)
    b1 = 0.1 * jax.random.normal(ks[5], (H,), jnp.float32)
    w2 = 0.1 * jax.random.normal(ks[6], (H, NT), jnp.float32)
    b2 = 0.1 * jax.random.normal(ks[7], (NT,), jnp.float32)
    return dict(word_emb=word_emb, char_emb=char_emb, conv_w=conv_w, conv_b=conv_b,
                w1=w1, b1=b1, w2=w2, b2=b2)


if __name__ == "__main__":
    key = jax.random.PRNGKey(0)
    kp, kw, kc = jax.random.split(key, 3)
    params = init_params(kp)

    word_row = jax.random.randint(kw, (B, 1, T), 1, V_WORD, dtype=jnp.int32)
    char_block = jax.random.randint(kc, (B, L, T), 0, V_CHAR, dtype=jnp.int32)
    packed_ids = jnp.concatenate([word_row, char_block], axis=1)   # (B, 1+L, 5)

    fwd = jax.jit(mlp_tagger_char_cnn_forward)
    out = jax.block_until_ready(fwd(packed_ids, params))

    ref = reference_forward(packed_ids, params)
    np.testing.assert_allclose(np.asarray(out), np.asarray(ref), rtol=1e-2, atol=1e-2)
    print("KERNEL_OK")
</pallas_src>

<mosaic_0001>
module attributes {stable_mosaic.version = 11 : i64} {
  func.func @_fused_kernel(%arg0: memref<116x1xi32, #tpu.memory_space<vmem>>, %arg1: memref<64x32xf32, #tpu.memory_space<vmem>>, %arg2: memref<21x16xf32, #tpu.memory_space<vmem>>, %arg3: memref<48x8xf32, #tpu.memory_space<vmem>>, %arg4: memref<5x40x32xf32, #tpu.memory_space<vmem>>, %arg5: memref<1x50xf32, #tpu.memory_space<vmem>>, %arg6: memref<32x10xf32, #tpu.memory_space<vmem>>, %arg7: memref<2x10xf32, #tpu.memory_space<vmem>>) attributes {dimension_semantics = [], scalar_prefetch = 0 : i64, scratch_operands = 0 : i64, tpu.core_type = #tpu.core_type<tc>} {
    %c0 = arith.constant 0 : index
    %c0_0 = arith.constant 0 : index
    %0 = vector.load %arg5[%c0, %c0_0] : memref<1x50xf32, #tpu.memory_space<vmem>>, vector<1x50xf32>
    %1 = vector.extract_strided_slice %0 {offsets = [0, 0], sizes = [1, 8], strides = [1, 1]} : vector<1x50xf32> to vector<1x8xf32>
    %2 = vector.extract_strided_slice %0 {offsets = [0, 8], sizes = [1, 32], strides = [1, 1]} : vector<1x50xf32> to vector<1x32xf32>
    %3 = vector.extract_strided_slice %0 {offsets = [0, 40], sizes = [1, 10], strides = [1, 1]} : vector<1x50xf32> to vector<1x10xf32>
    %c0_1 = arith.constant 0 : index
    %c0_2 = arith.constant 0 : index
    %4 = vector.load %arg0[%c0_1, %c0_2] : memref<116x1xi32, #tpu.memory_space<vmem>>, vector<10x1xi32>
    %5 = tpu.iota {dimensions = array<i32: 1>} : vector<10x64xi32>
    %6 = vector.broadcast %4 : vector<10x1xi32> to vector<10x64xi32>
    %7 = arith.cmpi eq, %5, %6 : vector<10x64xi32>
    %8 = arith.extui %7 : vector<10x64xi1> to vector<10x64xi32>
    %9 = arith.sitofp %8 : vector<10x64xi32> to vector<10x64xf32>
    %c0_3 = arith.constant 0 : index
    %c0_4 = arith.constant 0 : index
    %10 = vector.load %arg1[%c0_3, %c0_4] : memref<64x32xf32, #tpu.memory_space<vmem>>, vector<64x32xf32>
    %cst = arith.constant dense<0.000000e+00> : vector<10x32xf32>
    %11 = tpu.matmul %9, %10, %cst {dimension_numbers = #tpu.dot_dimension_numbers<[1], [0], [0], [1], [0, 0, 1, 1], [], []>} : vector<10x64xf32>, vector<64x32xf32>, vector<10x32xf32> -> vector<10x32xf32>
    %c16 = arith.constant 16 : index
    %c0_5 = arith.constant 0 : index
    %12 = vector.load %arg0[%c16, %c0_5] : memref<116x1xi32, #tpu.memory_space<vmem>>, vector<100x1xi32>
    %13 = tpu.iota {dimensions = array<i32: 1>} : vector<100x21xi32>
    %14 = vector.broadcast %12 : vector<100x1xi32> to vector<100x21xi32>
    %15 = arith.cmpi eq, %13, %14 : vector<100x21xi32>
    %16 = arith.extui %15 : vector<100x21xi1> to vector<100x21xi32>
    %17 = arith.sitofp %16 : vector<100x21xi32> to vector<100x21xf32>
    %c0_6 = arith.constant 0 : index
    %c0_7 = arith.constant 0 : index
    %18 = vector.load %arg2[%c0_6, %c0_7] : memref<21x16xf32, #tpu.memory_space<vmem>>, vector<21x16xf32>
    %cst_8 = arith.constant dense<0.000000e+00> : vector<100x16xf32>
    %19 = tpu.matmul %17, %18, %cst_8 {dimension_numbers = #tpu.dot_dimension_numbers<[1], [0], [0], [1], [0, 0, 1, 1], [], []>} : vector<100x21xf32>, vector<21x16xf32>, vector<100x16xf32> -> vector<100x16xf32>
    %20 = vector.shape_cast %19 : vector<100x16xf32> to vector<10x10x16xf32>
    %21 = vector.extract_strided_slice %20 {offsets = [0, 0, 0], sizes = [8, 10, 16], strides = [1, 1, 1]} : vector<10x10x16xf32> to vector<8x10x16xf32>
    %22 = vector.shape_cast %21 : vector<8x10x16xf32> to vector<80x16xf32>
    %23 = vector.extract_strided_slice %20 {offsets = [1, 0, 0], sizes = [8, 10, 16], strides = [1, 1, 1]} : vector<10x10x16xf32> to vector<8x10x16xf32>
    %24 = vector.shape_cast %23 : vector<8x10x16xf32> to vector<80x16xf32>
    %25 = vector.extract_strided_slice %20 {offsets = [2, 0, 0], sizes = [8, 10, 16], strides = [1, 1, 1]} : vector<10x10x16xf32> to vector<8x10x16xf32>
    %26 = vector.shape_cast %25 : vector<8x10x16xf32> to vector<80x16xf32>
    %27 = tpu.concatenate %22, %24, %26 in 1 : vector<80x16xf32>, vector<80x16xf32>, vector<80x16xf32> -> vector<80x48xf32>
    %c0_9 = arith.constant 0 : index
    %c0_10 = arith.constant 0 : index
    %28 = vector.load %arg3[%c0_9, %c0_10] : memref<48x8xf32, #tpu.memory_space<vmem>>, vector<48x8xf32>
    %cst_11 = arith.constant dense<0.000000e+00> : vector<80x8xf32>
    %29 = tpu.matmul %27, %28, %cst_11 {dimension_numbers = #tpu.dot_dimension_numbers<[1], [0], [0], [1], [0, 0, 1, 1], [], []>} : vector<80x48xf32>, vector<48x8xf32>, vector<80x8xf32> -> vector<80x8xf32>
    %30 = vector.shape_cast %29 : vector<80x8xf32> to vector<8x10x8xf32>
    %cst_12 = arith.constant dense<0xFF800000> : vector<10x8xf32>
    %31 = vector.multi_reduction <maximumf>, %30, %cst_12 [0] : vector<8x10x8xf32> to vector<10x8xf32>
    %32 = vector.broadcast %1 : vector<1x8xf32> to vector<10x8xf32>
    %33 = arith.addf %31, %32 : vector<10x8xf32>
    %34 = tpu.concatenate %11, %33 in 1 : vector<10x32xf32>, vector<10x8xf32> -> vector<10x40xf32>
    %35 = vector.shape_cast %34 : vector<10x40xf32> to vector<5x2x40xf32>
    %c0_13 = arith.constant 0 : index
    %c0_14 = arith.constant 0 : index
    %c0_15 = arith.constant 0 : index
    %36 = vector.load %arg4[%c0_13, %c0_14, %c0_15] : memref<5x40x32xf32, #tpu.memory_space<vmem>>, vector<5x40x32xf32>
    "tpu.trace_start"() <{level = 10 : i32, message = "tbd,tdh->tbh"}> : () -> ()
    %cst_16 = arith.constant dense<0.000000e+00> : vector<5x2x32xf32>
    %37 = tpu.matmul %35, %36, %cst_16 {dimension_numbers = #tpu.dot_dimension_numbers<[2], [1], [1], [2], [0, 0, 0, 1, 1, 2], [0], [0]>} : vector<5x2x40xf32>, vector<5x40x32xf32>, vector<5x2x32xf32> -> vector<5x2x32xf32>
    "tpu.trace_stop"() : () -> ()
    %cst_17 = arith.constant dense<0.000000e+00> : vector<2x32xf32>
    %38 = vector.multi_reduction <add>, %37, %cst_17 [0] : vector<5x2x32xf32> to vector<2x32xf32>
    %39 = vector.broadcast %2 : vector<1x32xf32> to vector<2x32xf32>
    %40 = arith.addf %38, %39 : vector<2x32xf32>
    %41 = math.tanh %40 : vector<2x32xf32>
    %c0_18 = arith.constant 0 : index
    %c0_19 = arith.constant 0 : index
    %42 = vector.load %arg6[%c0_18, %c0_19] : memref<32x10xf32, #tpu.memory_space<vmem>>, vector<32x10xf32>
    %cst_20 = arith.constant dense<0.000000e+00> : vector<2x10xf32>
    %43 = tpu.matmul %41, %42, %cst_20 {dimension_numbers = #tpu.dot_dimension_numbers<[1], [0], [0], [1], [0, 0, 1, 1], [], []>} : vector<2x32xf32>, vector<32x10xf32>, vector<2x10xf32> -> vector<2x10xf32>
    %44 = vector.broadcast %3 : vector<1x10xf32> to vector<2x10xf32>
    %45 = arith.addf %43, %44 : vector<2x10xf32>
    %c0_21 = arith.constant 0 : index
    %c0_22 = arith.constant 0 : index
    %46 = vector.load %arg7[%c0_21, %c0_22] : memref<2x10xf32, #tpu.memory_space<vmem>>, vector<2x10xf32>
    tpu.vector_store %arg7[%c0_21, %c0_22], %45 {strides = array<i32>} : memref<2x10xf32, #tpu.memory_space<vmem>>, vector<2x10xf32>,
    return
  }
}

</mosaic_0001>

<llo_original>
// kernel: mlp_tagger_char_cnn_forward.1
$region0: #{mlp_tagger_char_cnn_forward.1}
  #allocation0 [shape = 'u32[]', space=smem, size = 0x4, offset = 0x4, fixed_abs, tag = 'smem constant byte address 0x4 - core index']
  #allocation1 [shape = 'u32[144,128]{1,0:T(1,128)}', space=vmem, size = 0x12000, scoped, tag = 'internal scratch']
  %s0 = inlined_call_operand.vmem [shape: s32[116,1], index: 0, kind: input, shape index: {}]
  %s1 = inlined_call_operand.vmem [shape: f32[64,32], index: 1, kind: input, shape index: {}]
  %s2 = inlined_call_operand.vmem [shape: f32[21,16], index: 2, kind: input, shape index: {}]
  %s3 = inlined_call_operand.vmem [shape: f32[48,8], index: 3, kind: input, shape index: {}]
  %s4 = inlined_call_operand.vmem [shape: f32[5,40,32], index: 4, kind: input, shape index: {}]
  %s5 = inlined_call_operand.vmem [shape: f32[1,50], index: 5, kind: input, shape index: {}]
  %s6 = inlined_call_operand.vmem [shape: f32[32,10], index: 6, kind: input, shape index: {}]
  %s7 = inlined_call_operand.hbm [shape: f32[2,10], index: 7, kind: output, shape index: {}]
  %s8 = sld [smem:[#allocation0]]
  $region38: #{mlp_tagger_char_cnn_forward.1} parent=0
    _
  %s10 = ssub.s32 1, %s8
  %s11 = scalar_select 0, %s10, %s8
  $region1: #{mlp_tagger_char_cnn_forward.1} parent=0
    #allocation2 [shape = 'u8[1024]{0}', space=vmem, size = 0x400, scoped, tag = 'output window, operand 0, single buffered']
    #allocation3 [shape = 's32[1]{0}', space=sflag, size = 0x4, scoped, tag = 'scoped memory for mlp_tagger_char_cnn_forward.1']
    %12 = vsyncpa [#allocation3], 0
    // Predicated region
    $region2: #{mlp_tagger_char_cnn_forward.1} parent=1 // pred_check
      _
    $region3: #{mlp_tagger_char_cnn_forward.1} parent=1 // pred_check_branch
      %14 = sbr.rel (0) target = $region5
    $region4: #{mlp_tagger_char_cnn_forward.1} parent=1 // pred_region
      _
    $region5: #{mlp_tagger_char_cnn_forward.1} parent=1 // pred_fallthru
      _
    // Predicated region
    $region6: #{mlp_tagger_char_cnn_forward.1} parent=1 // pred_check
      _
    $region7: #{mlp_tagger_char_cnn_forward.1} parent=1 // pred_check_branch
      %16 = sbr.rel (0) target = $region9
    $region8: #{mlp_tagger_char_cnn_forward.1} parent=1 // pred_region
      _
    $region9: #{mlp_tagger_char_cnn_forward.1} parent=1 // pred_fallthru
      _
    // Predicated region
    $region10: #{mlp_tagger_char_cnn_forward.1} parent=1 // pred_check
      _
    $region11: #{mlp_tagger_char_cnn_forward.1} parent=1 // pred_check_branch
      %18 = sbr.rel (0) target = $region13
    $region12: #{mlp_tagger_char_cnn_forward.1} parent=1 // pred_region
      _
    $region13: #{mlp_tagger_char_cnn_forward.1} parent=1 // pred_fallthru
      _
    // Predicated region
    $region14: #{mlp_tagger_char_cnn_forward.1} parent=1 // pred_check
      _
    $region15: #{mlp_tagger_char_cnn_forward.1} parent=1 // pred_check_branch
      %20 = sbr.rel (0) target = $region17
    $region16: #{mlp_tagger_char_cnn_forward.1} parent=1 // pred_region
      _
    $region17: #{mlp_tagger_char_cnn_forward.1} parent=1 // pred_fallthru
      _
    // Predicated region
    $region18: #{mlp_tagger_char_cnn_forward.1} parent=1 // pred_check
      _
    $region19: #{mlp_tagger_char_cnn_forward.1} parent=1 // pred_check_branch
      %22 = sbr.rel (0) target = $region21
    $region20: #{mlp_tagger_char_cnn_forward.1} parent=1 // pred_region
      _
    $region21: #{mlp_tagger_char_cnn_forward.1} parent=1 // pred_fallthru
      _
    // Predicated region
    $region22: #{mlp_tagger_char_cnn_forward.1} parent=1 // pred_check
      _
    $region23: #{mlp_tagger_char_cnn_forward.1} parent=1 // pred_check_branch
      %24 = sbr.rel (0) target = $region25
    $region24: #{mlp_tagger_char_cnn_forward.1} parent=1 // pred_region
      _
    $region25: #{mlp_tagger_char_cnn_forward.1} parent=1 // pred_fallthru
      _
    // Predicated region
    $region26: #{mlp_tagger_char_cnn_forward.1} parent=1 // pred_check
      _
    $region27: #{mlp_tagger_char_cnn_forward.1} parent=1 // pred_check_branch
      %26 = sbr.rel (0) target = $region29
    $region28: #{mlp_tagger_char_cnn_forward.1} parent=1 // pred_region
      _
    $region29: #{mlp_tagger_char_cnn_forward.1} parent=1 // pred_fallthru
      _
    %v27 = vld [vmem:[%s5] sm:$0x1]
    %v28 = vld [vmem:[%s0] sm:$0xff]
    %v29 = vld [vmem:[%s0 + $0x8] sm:$0x3]
    %v30 = vlaneseq
    %v31 = vand.u32 %v30, 127
    %32 = vset.pattern.permute.xlu0 0
    %33 = vperm.xlu0 %32, %v28
    %v34 = vpop.permute.xlu0 %33
    %35 = vset.pattern.permute.xlu0 0
    %36 = vperm.xlu0 %35, %v29
    %v37 = vpop.permute.xlu0 %36
    %vm38 = vcmp.eq.s32.totalorder %v31, %v34
    %vm39 = vcmp.eq.s32.totalorder %v31, %v37
    %v40 = vsel %vm38, 1, 0
    %v41 = vsel %vm39, 1, 0
    %v42 = vcvt.s32.f32 %v40
    %v43 = vcvt.s32.f32 %v41
    %v44 = vld [vmem:[%s1] sm:$0xff]
    %v45 = vld [vmem:[%s1 + $0x8] sm:$0xff]
    %v46 = vld [vmem:[%s1 + $0x10] sm:$0xff]
    %v47 = vld [vmem:[%s1 + $0x18] sm:$0xff]
    %v48 = vld [vmem:[%s1 + $0x20] sm:$0xff]
    %v49 = vld [vmem:[%s1 + $0x28] sm:$0xff]
    %v50 = vld [vmem:[%s1 + $0x30] sm:$0xff]
    %v51 = vld [vmem:[%s1 + $0x38] sm:$0xff]
    %vm52 = vcmask 523264
    %v54 = vsel %vm52, %v42, 0
    %v57 = vsel %vm52, %v43, 0
    %59 = vmatprep.subr.mxu0 0.0
    %60 = vmatpush1.msra.mxu0 %v44
    %61 = vmatprep.subr.mxu0 0.0
    %62 = vmatpush1.msra.mxu0 %v45
    %63 = vmatprep.subr.mxu0 0.0
    %64 = vmatpush1.msra.mxu0 %v46
    %65 = vmatprep.subr.mxu0 0.0
    %66 = vmatpush1.msra.mxu0 %v47
    %67 = vmatprep.subr.mxu0 0.0
    %68 = vmatpush1.msra.mxu0 %v48
    %69 = vmatprep.subr.mxu0 0.0
    %70 = vmatpush1.msra.mxu0 %v49
    %71 = vmatprep.subr.mxu0 0.0
    %72 = vmatpush1.msra.mxu0 %v50
    %73 = vmatprep.subr.mxu0 0.0
    %74 = vmatpush1.msra.mxu0 %v51
    %75 = vmatprep.subr.mxu0 0.0
    %76 = vmatpush1.msra.mxu0 0.0
    %77 = vmatprep.subr.mxu0 0.0
    %78 = vmatpush1.msra.mxu0 0.0
    %79 = vmatprep.subr.mxu0 0.0
    %80 = vmatpush1.msra.mxu0 0.0
    %81 = vmatprep.subr.mxu0 0.0
    %82 = vmatpush1.msra.mxu0 0.0
    %83 = vmatprep.subr.mxu0 0.0
    %84 = vmatpush1.msra.mxu0 0.0
    %85 = vmatprep.subr.mxu0 0.0
    %86 = vmatpush1.msra.mxu0 0.0
    %87 = vmatprep.subr.mxu0 0.0
    %88 = vmatpush1.msra.mxu0 0.0
    %89 = vmatprep.subr.mxu0 0.0
    %90 = vmatpush1.msra.mxu0 0.0
    %91 = vmatprep.subr.mxu0 0.0
    %92 = vmatpush1.msra.mxu0 0.0
    %93 = vmatprep.subr.mxu0 0.0
    %94 = vmatpush1.msra.mxu0 0.0
    %95 = vmatprep.subr.mxu0 0.0
    %96 = vmatpush1.msra.mxu0 0.0
    %97 = vmatprep.subr.mxu0 0.0
    %98 = vmatpush1.msra.mxu0 0.0
    %99 = vmatprep.subr.mxu0 0.0
    %100 = vmatpush1.msra.mxu0 0.0
    %101 = vmatprep.subr.mxu0 0.0
    %102 = vmatpush1.msra.mxu0 0.0
    %103 = vmatprep.subr.mxu0 0.0
    %104 = vmatpush1.msra.mxu0 0.0
    %105 = vmatprep.subr.mxu0 0.0
    %106 = vmatpush1.msra.mxu0 0.0
    %107 = vmatprep.subr.mxu0 0.0
    %108 = vmatpush1.msra.mxu0 0.0
    %109 = vmatprep.subr.mxu0 0.0
    %110 = vmatpush1.msra.mxu0 0.0
    %111 = vmatprep.subr.mxu0 0.0
    %112 = vmatpush1.msra.mxu0 0.0
    %113 = vmatprep.subr.mxu0 0.0
    %114 = vmatpush1.msra.mxu0 0.0
    %115 = vmatprep.subr.mxu0 0.0
    %116 = vmatpush1.msra.mxu0 0.0
    %117 = vmatprep.subr.mxu0 0.0
    %118 = vmatpush1.msra.mxu0 0.0
    %119 = vmatprep.subr.mxu0 0.0
    %120 = vmatpush1.msra.mxu0 0.0
    %121 = vmatprep.subr.mxu0 0.0
    %122 = vmatpush1.msra.mxu0 0.0
    %123 = vmatprep.mubr.f32.mxu0 0.0
    %124 = vmatmul.mubr.f32.gmra.mrb[0].mxu0 %v54
    %v125 = vpop.f32.mrb[0].mxu0
    %v126 = vadd.f32 0.0, %v125
    %v127 = vpop.f32.mrb[0].mxu0
    %128 = vmatprep.mubr.f32.mxu0 0.0
    %129 = vmatmul.mubr.f32.gmra.mrb[0].mxu0 %v57
    %v130 = vpop.f32.mrb[0].mxu0
    %v131 = vadd.f32 0.0, %v130
    %v132 = vpop.f32.mrb[0].mxu0
    %133 = vdwg.mxu0
    %v134 = vld [vmem:[%s0 + $0x10] sm:$0xff]
    %v135 = vld [vmem:[%s0 + $0x18] sm:$0xff]
    %v136 = vld [vmem:[%s0 + $0x20] sm:$0xff]
    %v137 = vld [vmem:[%s0 + $0x28] sm:$0xff]
    %v138 = vld [vmem:[%s0 + $0x30] sm:$0xff]
    %v139 = vld [vmem:[%s0 + $0x38] sm:$0xff]
    %v140 = vld [vmem:[%s0 + $0x40] sm:$0xff]
    %v141 = vld [vmem:[%s0 + $0x48] sm:$0xff]
    %v142 = vld [vmem:[%s0 + $0x50] sm:$0xff]
    %v143 = vld [vmem:[%s0 + $0x58] sm:$0xff]
    %v144 = vld [vmem:[%s0 + $0x60] sm:$0xff]
    %v145 = vld [vmem:[%s0 + $0x68] sm:$0xff]
    %v146 = vld [vmem:[%s0 + $0x70] sm:$0xf]
    %147 = vset.pattern.permute.xlu0 0
    %148 = vperm.xlu0 %147, %v134
    %v149 = vpop.permute.xlu0 %148
    %150 = vset.pattern.permute.xlu0 0
    %151 = vperm.xlu0 %150, %v135
    %v152 = vpop.permute.xlu0 %151
    %153 = vset.pattern.permute.xlu0 0
    %154 = vperm.xlu0 %153, %v136
    %v155 = vpop.permute.xlu0 %154
    %156 = vset.pattern.permute.xlu0 0
    %157 = vperm.xlu0 %156, %v137
    %v158 = vpop.permute.xlu0 %157
    %159 = vset.pattern.permute.xlu0 0
    %160 = vperm.xlu0 %159, %v138
    %v161 = vpop.permute.xlu0 %160
    %162 = vset.pattern.permute.xlu0 0
    %163 = vperm.xlu0 %162, %v139
    %v164 = vpop.permute.xlu0 %163
    %165 = vset.pattern.permute.xlu0 0
    %166 = vperm.xlu0 %165, %v140
    %v167 = vpop.permute.xlu0 %166
    %168 = vset.pattern.permute.xlu0 0
    %169 = vperm.xlu0 %168, %v141
    %v170 = vpop.permute.xlu0 %169
    %171 = vset.pattern.permute.xlu0 0
    %172 = vperm.xlu0 %171, %v142
    %v173 = vpop.permute.xlu0 %172
    %174 = vset.pattern.permute.xlu0 0
    %175 = vperm.xlu0 %174, %v143
    %v176 = vpop.permute.xlu0 %175
    %177 = vset.pattern.permute.xlu0 0
    %178 = vperm.xlu0 %177, %v144
    %v179 = vpop.permute.xlu0 %178
    %180 = vset.pattern.permute.xlu0 0
    %181 = vperm.xlu0 %180, %v145
    %v182 = vpop.permute.xlu0 %181
    %183 = vset.pattern.permute.xlu0 0
    %184 = vperm.xlu0 %183, %v146
    %v185 = vpop.permute.xlu0 %184
    %vm186 = vcmp.eq.s32.totalorder %v31, %v149
    %vm187 = vcmp.eq.s32.totalorder %v31, %v152
    %vm188 = vcmp.eq.s32.totalorder %v31, %v155
    %vm189 = vcmp.eq.s32.totalorder %v31, %v158
    %vm190 = vcmp.eq.s32.totalorder %v31, %v161
    %vm191 = vcmp.eq.s32.totalorder %v31, %v164
    %vm192 = vcmp.eq.s32.totalorder %v31, %v167
    %vm193 = vcmp.eq.s32.totalorder %v31, %v170
    %vm194 = vcmp.eq.s32.totalorder %v31, %v173
    %vm195 = vcmp.eq.s32.totalorder %v31, %v176
    %vm196 = vcmp.eq.s32.totalorder %v31, %v179
    %vm197 = vcmp.eq.s32.totalorder %v31, %v182
    %vm198 = vcmp.eq.s32.totalorder %v31, %v185
    %v199 = vsel %vm186, 1, 0
    %v200 = vsel %vm187, 1, 0
    %v201 = vsel %vm188, 1, 0
    %v202 = vsel %vm189, 1, 0
    %v203 = vsel %vm190, 1, 0
    %v204 = vsel %vm191, 1, 0
    %v205 = vsel %vm192, 1, 0
    %v206 = vsel %vm193, 1, 0
    %v207 = vsel %vm194, 1, 0
    %v208 = vsel %vm195, 1, 0
    %v209 = vsel %vm196, 1, 0
    %v210 = vsel %vm197, 1, 0
    %v211 = vsel %vm198, 1, 0
    %v212 = vcvt.s32.f32 %v199
    %v213 = vcvt.s32.f32 %v200
    %v214 = vcvt.s32.f32 %v201
    %v215 = vcvt.s32.f32 %v202
    %v216 = vcvt.s32.f32 %v203
    %v217 = vcvt.s32.f32 %v204
    %v218 = vcvt.s32.f32 %v205
    %v219 = vcvt.s32.f32 %v206
    %v220 = vcvt.s32.f32 %v207
    %v221 = vcvt.s32.f32 %v208
    %v222 = vcvt.s32.f32 %v209
    %v223 = vcvt.s32.f32 %v210
    %v224 = vcvt.s32.f32 %v211
    %v225 = vld [vmem:[%s2] sm:$0xff]
    %v226 = vld [vmem:[%s2 + $0x8] sm:$0xff]
    %v227 = vld [vmem:[%s2 + $0x10] sm:$0x1f]
    %vm228 = vcmask 171008
    %v230 = vsel %vm228, %v212, 0
    %v233 = vsel %vm228, %v213, 0
    %v236 = vsel %vm228, %v214, 0
    %v239 = vsel %vm228, %v215, 0
    %v242 = vsel %vm228, %v216, 0
    %v245 = vsel %vm228, %v217, 0
    %v248 = vsel %vm228, %v218, 0
    %v251 = vsel %vm228, %v219, 0
    %v254 = vsel %vm228, %v220, 0
    %v257 = vsel %vm228, %v221, 0
    %v260 = vsel %vm228, %v222, 0
    %v263 = vsel %vm228, %v223, 0
    %v266 = vsel %vm228, %v224, 0
    %vm268 = vcmask 1044480
    %v270 = vsel %vm268, %v227, 0
    %272 = vmatprep.subr.mxu0 0.0
    %273 = vmatpush1.msra.mxu0 %v225
    %274 = vmatprep.subr.mxu0 0.0
    %275 = vmatpush1.msra.mxu0 %v226
    %276 = vmatprep.subr.mxu0 0.0
    %277 = vmatpush1.msra.mxu0 %v270
    %278 = vmatprep.subr.mxu0 0.0
    %279 = vmatpush1.msra.mxu0 0.0
    %280 = vmatprep.subr.mxu0 0.0
    %281 = vmatpush1.msra.mxu0 0.0
    %282 = vmatprep.subr.mxu0 0.0
    %283 = vmatpush1.msra.mxu0 0.0
    %284 = vmatprep.subr.mxu0 0.0
    %285 = vmatpush1.msra.mxu0 0.0
    %286 = vmatprep.subr.mxu0 0.0
    %287 = vmatpush1.msra.mxu0 0.0
    %288 = vmatprep.subr.mxu0 0.0
    %289 = vmatpush1.msra.mxu0 0.0
    %290 = vmatprep.subr.mxu0 0.0
    %291 = vmatpush1.msra.mxu0 0.0
    %292 = vmatprep.subr.mxu0 0.0
    %293 = vmatpush1.msra.mxu0 0.0
    %294 = vmatprep.subr.mxu0 0.0
    %295 = vmatpush1.msra.mxu0 0.0
    %296 = vmatprep.subr.mxu0 0.0
    %297 = vmatpush1.msra.mxu0 0.0
    %298 = vmatprep.subr.mxu0 0.0
    %299 = vmatpush1.msra.mxu0 0.0
    %300 = vmatprep.subr.mxu0 0.0
    %301 = vmatpush1.msra.mxu0 0.0
    %302 = vmatprep.subr.mxu0 0.0
    %303 = vmatpush1.msra.mxu0 0.0
    %304 = vmatprep.subr.mxu0 0.0
    %305 = vmatpush1.msra.mxu0 0.0
    %306 = vmatprep.subr.mxu0 0.0
    %307 = vmatpush1.msra.mxu0 0.0
    %308 = vmatprep.subr.mxu0 0.0
    %309 = vmatpush1.msra.mxu0 0.0
    %310 = vmatprep.subr.mxu0 0.0
    %311 = vmatpush1.msra.mxu0 0.0
    %312 = vmatprep.subr.mxu0 0.0
    %313 = vmatpush1.msra.mxu0 0.0
    %314 = vmatprep.subr.mxu0 0.0
    %315 = vmatpush1.msra.mxu0 0.0
    %316 = vmatprep.subr.mxu0 0.0
    %317 = vmatpush1.msra.mxu0 0.0
    %318 = vmatprep.subr.mxu0 0.0
    %319 = vmatpush1.msra.mxu0 0.0
    %320 = vmatprep.subr.mxu0 0.0
    %321 = vmatpush1.msra.mxu0 0.0
    %322 = vmatprep.subr.mxu0 0.0
    %323 = vmatpush1.msra.mxu0 0.0
    %324 = vmatprep.subr.mxu0 0.0
    %325 = vmatpush1.msra.mxu0 0.0
    %326 = vmatprep.subr.mxu0 0.0
    %327 = vmatpush1.msra.mxu0 0.0
    %328 = vmatprep.subr.mxu0 0.0
    %329 = vmatpush1.msra.mxu0 0.0
    %330 = vmatprep.subr.mxu0 0.0
    %331 = vmatpush1.msra.mxu0 0.0
    %332 = vmatprep.subr.mxu0 0.0
    %333 = vmatpush1.msra.mxu0 0.0
    %334 = vmatprep.subr.mxu0 0.0
    %335 = vmatpush1.msra.mxu0 0.0
    %336 = vmatprep.mubr.f32.mxu0 0.0
    %337 = vmatmul.mubr.f32.gmra.mrb[0].mxu0 %v230
    %v338 = vpop.f32.mrb[0].mxu0
    %v339 = vadd.f32 0.0, %v338
    %v340 = vpop.f32.mrb[0].mxu0
    %341 = vmatprep.mubr.f32.mxu0 0.0
    %342 = vmatmul.mubr.f32.gmra.mrb[0].mxu0 %v233
    %v343 = vpop.f32.mrb[0].mxu0
    %v344 = vadd.f32 0.0, %v343
    %v345 = vpop.f32.mrb[0].mxu0
    %346 = vmatprep.mubr.f32.mxu0 0.0
    %347 = vmatmul.mubr.f32.gmra.mrb[0].mxu0 %v236
    %v348 = vpop.f32.mrb[0].mxu0
    %v349 = vadd.f32 0.0, %v348
    %v350 = vpop.f32.mrb[0].mxu0
    %351 = vmatprep.mubr.f32.mxu0 0.0
    %352 = vmatmul.mubr.f32.gmra.mrb[0].mxu0 %v239
    %v353 = vpop.f32.mrb[0].mxu0
    %v354 = vadd.f32 0.0, %v353
    %v355 = vpop.f32.mrb[0].mxu0
    %356 = vmatprep.mubr.f32.mxu0 0.0
    %357 = vmatmul.mubr.f32.gmra.mrb[0].mxu0 %v242
    %v358 = vpop.f32.mrb[0].mxu0
    %v359 = vadd.f32 0.0, %v358
    %v360 = vpop.f32.mrb[0].mxu0
    %361 = vmatprep.mubr.f32.mxu0 0.0
    %362 = vmatmul.mubr.f32.gmra.mrb[0].mxu0 %v245
    %v363 = vpop.f32.mrb[0].mxu0
    %v364 = vadd.f32 0.0, %v363
    %v365 = vpop.f32.mrb[0].mxu0
    %366 = vmatprep.mubr.f32.mxu0 0.0
    %367 = vmatmul.mubr.f32.gmra.mrb[0].mxu0 %v248
    %v368 = vpop.f32.mrb[0].mxu0
    %v369 = vadd.f32 0.0, %v368
    %v370 = vpop.f32.mrb[0].mxu0
    %371 = vmatprep.mubr.f32.mxu0 0.0
    %372 = vmatmul.mubr.f32.gmra.mrb[0].mxu0 %v251
    %v373 = vpop.f32.mrb[0].mxu0
    %v374 = vadd.f32 0.0, %v373
    %v375 = vpop.f32.mrb[0].mxu0
    %376 = vmatprep.mubr.f32.mxu0 0.0
    %377 = vmatmul.mubr.f32.gmra.mrb[0].mxu0 %v254
    %v378 = vpop.f32.mrb[0].mxu0
    %v379 = vadd.f32 0.0, %v378
    %v380 = vpop.f32.mrb[0].mxu0
    %381 = vmatprep.mubr.f32.mxu0 0.0
    %382 = vmatmul.mubr.f32.gmra.mrb[0].mxu0 %v257
    %v383 = vpop.f32.mrb[0].mxu0
    %v384 = vadd.f32 0.0, %v383
    %v385 = vpop.f32.mrb[0].mxu0
    %386 = vmatprep.mubr.f32.mxu0 0.0
    %387 = vmatmul.mubr.f32.gmra.mrb[0].mxu0 %v260
    %v388 = vpop.f32.mrb[0].mxu0
    %v389 = vadd.f32 0.0, %v388
    %v390 = vpop.f32.mrb[0].mxu0
    %391 = vmatprep.mubr.f32.mxu0 0.0
    %392 = vmatmul.mubr.f32.gmra.mrb[0].mxu0 %v263
    %v393 = vpop.f32.mrb[0].mxu0
    %v394 = vadd.f32 0.0, %v393
    %v395 = vpop.f32.mrb[0].mxu0
    %396 = vmatprep.mubr.f32.mxu0 0.0
    %397 = vmatmul.mubr.f32.gmra.mrb[0].mxu0 %v266
    %v398 = vpop.f32.mrb[0].mxu0
    %v399 = vadd.f32 0.0, %v398
    %v400 = vpop.f32.mrb[0].mxu0
    %401 = vdwg.mxu0
    %v415 = vcombine.high %v339, %v339
    %v417 = vunpack.c.l.s4 1983009808
    %v418 = vunpack.c.0.s8 %v417
    %v419 = vlaneseq
    %v420 = vshrl.u32 %v419, 7
    %v421 = vsub.s32 %v418, %v420
    %v422 = vrot.slane %v339, %v421
    %v424 = vunpack.c.l.s4 1983009808
    %v425 = vunpack.c.0.s8 %v424
    %v426 = vlaneseq
    %v427 = vshrl.u32 %v426, 7
    %v428 = vsub.s32 %v425, %v427
    %v429 = vrot.slane %v415, %v428
    %v430 = vcombine.high %v422, %v422
    %v431 = vcombine.high %v429, %v429
    %v432 = vcombine.high %v344, %v344
    %v434 = vunpack.c.l.s4 1983009808
    %v435 = vunpack.c.0.s8 %v434
    %v436 = vlaneseq
    %v437 = vshrl.u32 %v436, 7
    %v438 = vsub.s32 %v435, %v437
    %v439 = vrot.slane %v344, %v438
    %v441 = vunpack.c.l.s4 1983009808
    %v442 = vunpack.c.0.s8 %v441
    %v443 = vlaneseq
    %v444 = vshrl.u32 %v443, 7
    %v445 = vsub.s32 %v442, %v444
    %v446 = vrot.slane %v432, %v445
    %v447 = vcombine.high %v439, %v439
    %v448 = vcombine.high %v446, %v446
    %v449 = vcombine.high %v349, %v349
    %v451 = vunpack.c.l.s4 1983009808
    %v452 = vunpack.c.0.s8 %v451
    %v453 = vlaneseq
    %v454 = vshrl.u32 %v453, 7
    %v455 = vsub.s32 %v452, %v454
    %v456 = vrot.slane %v349, %v455
    %v458 = vunpack.c.l.s4 1983009808
    %v459 = vunpack.c.0.s8 %v458
    %v460 = vlaneseq
    %v461 = vshrl.u32 %v460, 7
    %v462 = vsub.s32 %v459, %v461
    %v463 = vrot.slane %v449, %v462
    %v464 = vcombine.high %v456, %v456
    %v465 = vcombine.high %v463, %v463
    %v466 = vcombine.high %v354, %v354
    %v468 = vunpack.c.l.s4 1983009808
    %v469 = vunpack.c.0.s8 %v468
    %v470 = vlaneseq
    %v471 = vshrl.u32 %v470, 7
    %v472 = vsub.s32 %v469, %v471
    %v473 = vrot.slane %v354, %v472
    %v475 = vunpack.c.l.s4 1983009808
    %v476 = vunpack.c.0.s8 %v475
    %v477 = vlaneseq
    %v478 = vshrl.u32 %v477, 7
    %v479 = vsub.s32 %v476, %v478
    %v480 = vrot.slane %v466, %v479
    %v481 = vcombine.high %v473, %v473
    %v482 = vcombine.high %v480, %v480
    %v483 = vcombine.high %v359, %v359
    %v485 = vunpack.c.l.s4 1983009808
    %v486 = vunpack.c.0.s8 %v485
    %v487 = vlaneseq
    %v488 = vshrl.u32 %v487, 7
    %v489 = vsub.s32 %v486, %v488
    %v490 = vrot.slane %v359, %v489
    %v492 = vunpack.c.l.s4 1983009808
    %v493 = vunpack.c.0.s8 %v492
    %v494 = vlaneseq
    %v495 = vshrl.u32 %v494, 7
    %v496 = vsub.s32 %v493, %v495
    %v497 = vrot.slane %v483, %v496
    %v498 = vcombine.high %v490, %v490
    %v499 = vcombine.high %v497, %v497
    %v500 = vcombine.high %v364, %v364
    %v502 = vunpack.c.l.s4 1983009808
    %v503 = vunpack.c.0.s8 %v502
    %v504 = vlaneseq
    %v505 = vshrl.u32 %v504, 7
    %v506 = vsub.s32 %v503, %v505
    %v507 = vrot.slane %v364, %v506
    %v509 = vunpack.c.l.s4 1983009808
    %v510 = vunpack.c.0.s8 %v509
    %v511 = vlaneseq
    %v512 = vshrl.u32 %v511, 7
    %v513 = vsub.s32 %v510, %v512
    %v514 = vrot.slane %v500, %v513
    %v515 = vcombine.high %v507, %v507
    %v516 = vcombine.high %v514, %v514
    %v517 = vcombine.high %v369, %v369
    %v519 = vunpack.c.l.s4 1983009808
    %v520 = vunpack.c.0.s8 %v519
    %v521 = vlaneseq
    %v522 = vshrl.u32 %v521, 7
    %v523 = vsub.s32 %v520, %v522
    %v524 = vrot.slane %v369, %v523
    %v526 = vunpack.c.l.s4 1983009808
    %v527 = vunpack.c.0.s8 %v526
    %v528 = vlaneseq
    %v529 = vshrl.u32 %v528, 7
    %v530 = vsub.s32 %v527, %v529
    %v531 = vrot.slane %v517, %v530
    %v532 = vcombine.high %v524, %v524
    %v533 = vcombine.high %v531, %v531
    %v534 = vcombine.high %v374, %v374
    %v536 = vunpack.c.l.s4 1983009808
    %v537 = vunpack.c.0.s8 %v536
    %v538 = vlaneseq
    %v539 = vshrl.u32 %v538, 7
    %v540 = vsub.s32 %v537, %v539
    %v541 = vrot.slane %v374, %v540
    %v543 = vunpack.c.l.s4 1983009808
    %v544 = vunpack.c.0.s8 %v543
    %v545 = vlaneseq
    %v546 = vshrl.u32 %v545, 7
    %v547 = vsub.s32 %v544, %v546
    %v548 = vrot.slane %v534, %v547
    %v549 = vcombine.high %v541, %v541
    %v550 = vcombine.high %v548, %v548
    %v551 = vcombine.high %v379, %v379
    %v553 = vunpack.c.l.s4 1983009808
    %v554 = vunpack.c.0.s8 %v553
    %v555 = vlaneseq
    %v556 = vshrl.u32 %v555, 7
    %v557 = vsub.s32 %v554, %v556
    %v558 = vrot.slane %v379, %v557
    %v560 = vunpack.c.l.s4 1983009808
    %v561 = vunpack.c.0.s8 %v560
    %v562 = vlaneseq
    %v563 = vshrl.u32 %v562, 7
    %v564 = vsub.s32 %v561, %v563
    %v565 = vrot.slane %v551, %v564
    %v566 = vcombine.high %v558, %v558
    %v567 = vcombine.high %v565, %v565
    %v568 = vcombine.high %v384, %v384
    %v570 = vunpack.c.l.s4 1983009808
    %v571 = vunpack.c.0.s8 %v570
    %v572 = vlaneseq
    %v573 = vshrl.u32 %v572, 7
    %v574 = vsub.s32 %v571, %v573
    %v575 = vrot.slane %v384, %v574
    %v577 = vunpack.c.l.s4 1983009808
    %v578 = vunpack.c.0.s8 %v577
    %v579 = vlaneseq
    %v580 = vshrl.u32 %v579, 7
    %v581 = vsub.s32 %v578, %v580
    %v582 = vrot.slane %v568, %v581
    %v583 = vcombine.high %v575, %v575
    %v584 = vcombine.high %v582, %v582
    %v585 = vcombine.high %v389, %v389
    %v587 = vunpack.c.l.s4 1983009808
    %v588 = vunpack.c.0.s8 %v587
    %v589 = vlaneseq
    %v590 = vshrl.u32 %v589, 7
    %v591 = vsub.s32 %v588, %v590
    %v592 = vrot.slane %v389, %v591
    %v594 = vunpack.c.l.s4 1983009808
    %v595 = vunpack.c.0.s8 %v594
    %v596 = vlaneseq
    %v597 = vshrl.u32 %v596, 7
    %v598 = vsub.s32 %v595, %v597
    %v599 = vrot.slane %v585, %v598
    %v600 = vcombine.high %v592, %v592
    %v601 = vcombine.high %v599, %v599
    %v602 = vcombine.high %v394, %v394
    %v604 = vunpack.c.l.s4 1983009808
    %v605 = vunpack.c.0.s8 %v604
    %v606 = vlaneseq
    %v607 = vshrl.u32 %v606, 7
    %v608 = vsub.s32 %v605, %v607
    %v609 = vrot.slane %v394, %v608
    %v611 = vunpack.c.l.s4 1983009808
    %v612 = vunpack.c.0.s8 %v611
    %v613 = vlaneseq
    %v614 = vshrl.u32 %v613, 7
    %v615 = vsub.s32 %v612, %v614
    %v616 = vrot.slane %v602, %v615
    %v617 = vcombine.high %v609, %v609
    %v618 = vcombine.high %v616, %v616
    %v620 = vunpack.c.l.s4 1983009808
    %v621 = vunpack.c.0.s8 %v620
    %v622 = vlaneseq
    %v623 = vshrl.u32 %v622, 7
    %v624 = vsub.s32 %v621, %v623
    %v625 = vrot.slane %v399, %v624
    %v626 = vcombine.high %v625, %v625
    %v627 = vcombine.low %v422, %v430
    %v628 = vcombine.low %v429, %v431
    %v630 = vunpack.c.l.s4 1983009808
    %v631 = vunpack.c.0.s8 %v630
    %v632 = vlaneseq
    %v633 = vshrl.u32 %v632, 7
    %v634 = vsub.s32 %v631, %v633
    %v635 = vrot.slane %v627, %v634
    %v637 = vunpack.c.l.s4 1983009808
    %v638 = vunpack.c.0.s8 %v637
    %v639 = vlaneseq
    %v640 = vshrl.u32 %v639, 7
    %v641 = vsub.s32 %v638, %v640
    %v642 = vrot.slane %v628, %v641
    %v643 = vcombine.low %v635, %v642
    %v644 = vcombine.low %v439, %v447
    %v645 = vcombine.low %v446, %v448
    %v647 = vunpack.c.l.s4 1983009808
    %v648 = vunpack.c.0.s8 %v647
    %v649 = vlaneseq
    %v650 = vshrl.u32 %v649, 7
    %v651 = vsub.s32 %v648, %v650
    %v652 = vrot.slane %v644, %v651
    %v654 = vunpack.c.l.s4 1983009808
    %v655 = vunpack.c.0.s8 %v654
    %v656 = vlaneseq
    %v657 = vshrl.u32 %v656, 7
    %v658 = vsub.s32 %v655, %v657
    %v659 = vrot.slane %v645, %v658
    %v660 = vcombine.low %v652, %v659
    %v661 = vcombine.low %v456, %v464
    %v662 = vcombine.low %v463, %v465
    %v664 = vunpack.c.l.s4 1983009808
    %v665 = vunpack.c.0.s8 %v664
    %v666 = vlaneseq
    %v667 = vshrl.u32 %v666, 7
    %v668 = vsub.s32 %v665, %v667
    %v669 = vrot.slane %v661, %v668
    %v671 = vunpack.c.l.s4 1983009808
    %v672 = vunpack.c.0.s8 %v671
    %v673 = vlaneseq
    %v674 = vshrl.u32 %v673, 7
    %v675 = vsub.s32 %v672, %v674
    %v676 = vrot.slane %v662, %v675
    %v677 = vcombine.low %v669, %v676
    %v678 = vcombine.low %v473, %v481
    %v679 = vcombine.low %v480, %v482
    %v681 = vunpack.c.l.s4 1983009808
    %v682 = vunpack.c.0.s8 %v681
    %v683 = vlaneseq
    %v684 = vshrl.u32 %v683, 7
    %v685 = vsub.s32 %v682, %v684
    %v686 = vrot.slane %v678, %v685
    %v688 = vunpack.c.l.s4 1983009808
    %v689 = vunpack.c.0.s8 %v688
    %v690 = vlaneseq
    %v691 = vshrl.u32 %v690, 7
    %v692 = vsub.s32 %v689, %v691
    %v693 = vrot.slane %v679, %v692
    %v694 = vcombine.low %v686, %v693
    %v695 = vcombine.low %v490, %v498
    %v696 = vcombine.low %v497, %v499
    %v698 = vunpack.c.l.s4 1983009808
    %v699 = vunpack.c.0.s8 %v698
    %v700 = vlaneseq
    %v701 = vshrl.u32 %v700, 7
    %v702 = vsub.s32 %v699, %v701
    %v703 = vrot.slane %v695, %v702
    %v705 = vunpack.c.l.s4 1983009808
    %v706 = vunpack.c.0.s8 %v705
    %v707 = vlaneseq
    %v708 = vshrl.u32 %v707, 7
    %v709 = vsub.s32 %v706, %v708
    %v710 = vrot.slane %v696, %v709
    %v711 = vcombine.low %v703, %v710
    %v712 = vcombine.low %v507, %v515
    %v713 = vcombine.low %v514, %v516
    %v715 = vunpack.c.l.s4 1983009808
    %v716 = vunpack.c.0.s8 %v715
    %v717 = vlaneseq
    %v718 = vshrl.u32 %v717, 7
    %v719 = vsub.s32 %v716, %v718
    %v720 = vrot.slane %v712, %v719
    %v722 = vunpack.c.l.s4 1983009808
    %v723 = vunpack.c.0.s8 %v722
    %v724 = vlaneseq
    %v725 = vshrl.u32 %v724, 7
    %v726 = vsub.s32 %v723, %v725
    %v727 = vrot.slane %v713, %v726
    %v728 = vcombine.low %v720, %v727
    %v729 = vcombine.low %v524, %v532
    %v730 = vcombine.low %v531, %v533
    %v732 = vunpack.c.l.s4 1983009808
    %v733 = vunpack.c.0.s8 %v732
    %v734 = vlaneseq
    %v735 = vshrl.u32 %v734, 7
    %v736 = vsub.s32 %v733, %v735
    %v737 = vrot.slane %v729, %v736
    %v739 = vunpack.c.l.s4 1983009808
    %v740 = vunpack.c.0.s8 %v739
    %v741 = vlaneseq
    %v742 = vshrl.u32 %v741, 7
    %v743 = vsub.s32 %v740, %v742
    %v744 = vrot.slane %v730, %v743
    %v745 = vcombine.low %v737, %v744
    %v746 = vcombine.low %v541, %v549
    %v747 = vcombine.low %v548, %v550
    %v749 = vunpack.c.l.s4 1983009808
    %v750 = vunpack.c.0.s8 %v749
    %v751 = vlaneseq
    %v752 = vshrl.u32 %v751, 7
    %v753 = vsub.s32 %v750, %v752
    %v754 = vrot.slane %v746, %v753
    %v756 = vunpack.c.l.s4 1983009808
    %v757 = vunpack.c.0.s8 %v756
    %v758 = vlaneseq
    %v759 = vshrl.u32 %v758, 7
    %v760 = vsub.s32 %v757, %v759
    %v761 = vrot.slane %v747, %v760
    %v762 = vcombine.low %v754, %v761
    %v763 = vcombine.low %v558, %v566
    %v764 = vcombine.low %v565, %v567
    %v766 = vunpack.c.l.s4 1983009808
    %v767 = vunpack.c.0.s8 %v766
    %v768 = vlaneseq
    %v769 = vshrl.u32 %v768, 7
    %v770 = vsub.s32 %v767, %v769
    %v771 = vrot.slane %v763, %v770
    %v773 = vunpack.c.l.s4 1983009808
    %v774 = vunpack.c.0.s8 %v773
    %v775 = vlaneseq
    %v776 = vshrl.u32 %v775, 7
    %v777 = vsub.s32 %v774, %v776
    %v778 = vrot.slane %v764, %v777
    %v779 = vcombine.low %v771, %v778
    %v780 = vcombine.low %v575, %v583
    %v781 = vcombine.low %v582, %v584
    %v783 = vunpack.c.l.s4 1983009808
    %v784 = vunpack.c.0.s8 %v783
    %v785 = vlaneseq
    %v786 = vshrl.u32 %v785, 7
    %v787 = vsub.s32 %v784, %v786
    %v788 = vrot.slane %v780, %v787
    %v790 = vunpack.c.l.s4 1983009808
    %v791 = vunpack.c.0.s8 %v790
    %v792 = vlaneseq
    %v793 = vshrl.u32 %v792, 7
    %v794 = vsub.s32 %v791, %v793
    %v795 = vrot.slane %v781, %v794
    %v796 = vcombine.low %v788, %v795
    %v807 = vcombine.low %v447, %v446
    %v808 = vcombine.low %v448, %v456
    %v810 = vunpack.c.l.s4 1983009808
    %v811 = vunpack.c.0.s8 %v810
    %v812 = vlaneseq
    %v813 = vshrl.u32 %v812, 7
    %v814 = vsub.s32 %v811, %v813
    %v815 = vrot.slane %v807, %v814
    %v817 = vunpack.c.l.s4 1983009808
    %v818 = vunpack.c.0.s8 %v817
    %v819 = vlaneseq
    %v820 = vshrl.u32 %v819, 7
    %v821 = vsub.s32 %v818, %v820
    %v822 = vrot.slane %v808, %v821
    %v823 = vcombine.low %v815, %v822
    %v824 = vcombine.low %v464, %v463
    %v825 = vcombine.low %v465, %v473
    %v827 = vunpack.c.l.s4 1983009808
    %v828 = vunpack.c.0.s8 %v827
    %v829 = vlaneseq
    %v830 = vshrl.u32 %v829, 7
    %v831 = vsub.s32 %v828, %v830
    %v832 = vrot.slane %v824, %v831
    %v834 = vunpack.c.l.s4 1983009808
    %v835 = vunpack.c.0.s8 %v834
    %v836 = vlaneseq
    %v837 = vshrl.u32 %v836, 7
    %v838 = vsub.s32 %v835, %v837
    %v839 = vrot.slane %v825, %v838
    %v840 = vcombine.low %v832, %v839
    %v841 = vcombine.low %v481, %v480
    %v842 = vcombine.low %v482, %v490
    %v844 = vunpack.c.l.s4 1983009808
    %v845 = vunpack.c.0.s8 %v844
    %v846 = vlaneseq
    %v847 = vshrl.u32 %v846, 7
    %v848 = vsub.s32 %v845, %v847
    %v849 = vrot.slane %v841, %v848
    %v851 = vunpack.c.l.s4 1983009808
    %v852 = vunpack.c.0.s8 %v851
    %v853 = vlaneseq
    %v854 = vshrl.u32 %v853, 7
    %v855 = vsub.s32 %v852, %v854
    %v856 = vrot.slane %v842, %v855
    %v857 = vcombine.low %v849, %v856
    %v858 = vcombine.low %v498, %v497
    %v859 = vcombine.low %v499, %v507
    %v861 = vunpack.c.l.s4 1983009808
    %v862 = vunpack.c.0.s8 %v861
    %v863 = vlaneseq
    %v864 = vshrl.u32 %v863, 7
    %v865 = vsub.s32 %v862, %v864
    %v866 = vrot.slane %v858, %v865
    %v868 = vunpack.c.l.s4 1983009808
    %v869 = vunpack.c.0.s8 %v868
    %v870 = vlaneseq
    %v871 = vshrl.u32 %v870, 7
    %v872 = vsub.s32 %v869, %v871
    %v873 = vrot.slane %v859, %v872
    %v874 = vcombine.low %v866, %v873
    %v875 = vcombine.low %v515, %v514
    %v876 = vcombine.low %v516, %v524
    %v878 = vunpack.c.l.s4 1983009808
    %v879 = vunpack.c.0.s8 %v878
    %v880 = vlaneseq
    %v881 = vshrl.u32 %v880, 7
    %v882 = vsub.s32 %v879, %v881
    %v883 = vrot.slane %v875, %v882
    %v885 = vunpack.c.l.s4 1983009808
    %v886 = vunpack.c.0.s8 %v885
    %v887 = vlaneseq
    %v888 = vshrl.u32 %v887, 7
    %v889 = vsub.s32 %v886, %v888
    %v890 = vrot.slane %v876, %v889
    %v891 = vcombine.low %v883, %v890
    %v892 = vcombine.low %v532, %v531
    %v893 = vcombine.low %v533, %v541
    %v895 = vunpack.c.l.s4 1983009808
    %v896 = vunpack.c.0.s8 %v895
    %v897 = vlaneseq
    %v898 = vshrl.u32 %v897, 7
    %v899 = vsub.s32 %v896, %v898
    %v900 = vrot.slane %v892, %v899
    %v902 = vunpack.c.l.s4 1983009808
    %v903 = vunpack.c.0.s8 %v902
    %v904 = vlaneseq
    %v905 = vshrl.u32 %v904, 7
    %v906 = vsub.s32 %v903, %v905
    %v907 = vrot.slane %v893, %v906
    %v908 = vcombine.low %v900, %v907
    %v909 = vcombine.low %v549, %v548
    %v910 = vcombine.low %v550, %v558
    %v912 = vunpack.c.l.s4 1983009808
    %v913 = vunpack.c.0.s8 %v912
    %v914 = vlaneseq
    %v915 = vshrl.u32 %v914, 7
    %v916 = vsub.s32 %v913, %v915
    %v917 = vrot.slane %v909, %v916
    %v919 = vunpack.c.l.s4 1983009808
    %v920 = vunpack.c.0.s8 %v919
    %v921 = vlaneseq
    %v922 = vshrl.u32 %v921, 7
    %v923 = vsub.s32 %v920, %v922
    %v924 = vrot.slane %v910, %v923
    %v925 = vcombine.low %v917, %v924
    %v926 = vcombine.low %v566, %v565
    %v927 = vcombine.low %v567, %v575
    %v929 = vunpack.c.l.s4 1983009808
    %v930 = vunpack.c.0.s8 %v929
    %v931 = vlaneseq
    %v932 = vshrl.u32 %v931, 7
    %v933 = vsub.s32 %v930, %v932
    %v934 = vrot.slane %v926, %v933
    %v936 = vunpack.c.l.s4 1983009808
    %v937 = vunpack.c.0.s8 %v936
    %v938 = vlaneseq
    %v939 = vshrl.u32 %v938, 7
    %v940 = vsub.s32 %v937, %v939
    %v941 = vrot.slane %v927, %v940
    %v942 = vcombine.low %v934, %v941
    %v943 = vcombine.low %v583, %v582
    %v944 = vcombine.low %v584, %v592
    %v946 = vunpack.c.l.s4 1983009808
    %v947 = vunpack.c.0.s8 %v946
    %v948 = vlaneseq
    %v949 = vshrl.u32 %v948, 7
    %v950 = vsub.s32 %v947, %v949
    %v951 = vrot.slane %v943, %v950
    %v953 = vunpack.c.l.s4 1983009808
    %v954 = vunpack.c.0.s8 %v953
    %v955 = vlaneseq
    %v956 = vshrl.u32 %v955, 7
    %v957 = vsub.s32 %v954, %v956
    %v958 = vrot.slane %v944, %v957
    %v959 = vcombine.low %v951, %v958
    %v960 = vcombine.low %v600, %v599
    %v961 = vcombine.low %v601, %v609
    %v963 = vunpack.c.l.s4 1983009808
    %v964 = vunpack.c.0.s8 %v963
    %v965 = vlaneseq
    %v966 = vshrl.u32 %v965, 7
    %v967 = vsub.s32 %v964, %v966
    %v968 = vrot.slane %v960, %v967
    %v970 = vunpack.c.l.s4 1983009808
    %v971 = vunpack.c.0.s8 %v970
    %v972 = vlaneseq
    %v973 = vshrl.u32 %v972, 7
    %v974 = vsub.s32 %v971, %v973
    %v975 = vrot.slane %v961, %v974
    %v976 = vcombine.low %v968, %v975
    %977 = vrot.lane.b32.xlu0 %v823, 16
    %v978 = vpop.permute.xlu0 %977
    %979 = vrot.lane.b32.xlu0 %v840, 16
    %v980 = vpop.permute.xlu0 %979
    %981 = vrot.lane.b32.xlu0 %v857, 16
    %v982 = vpop.permute.xlu0 %981
    %983 = vrot.lane.b32.xlu0 %v874, 16
    %v984 = vpop.permute.xlu0 %983
    %985 = vrot.lane.b32.xlu0 %v891, 16
    %v986 = vpop.permute.xlu0 %985
    %987 = vrot.lane.b32.xlu0 %v908, 16
    %v988 = vpop.permute.xlu0 %987
    %989 = vrot.lane.b32.xlu0 %v925, 16
    %v990 = vpop.permute.xlu0 %989
    %991 = vrot.lane.b32.xlu0 %v942, 16
    %v992 = vpop.permute.xlu0 %991
    %993 = vrot.lane.b32.xlu0 %v959, 16
    %v994 = vpop.permute.xlu0 %993
    %995 = vrot.lane.b32.xlu0 %v976, 16
    %v996 = vpop.permute.xlu0 %995
    %v1007 = vcombine.low %v676, %v686
    %v1008 = vcombine.low %v693, %v703
    %v1009 = vcombine.low %v710, %v720
    %v1010 = vcombine.low %v727, %v737
    %v1011 = vcombine.low %v744, %v754
    %v1012 = vcombine.low %v761, %v771
    %v1013 = vcombine.low %v778, %v788
    %v1014 = vcombine.low %v592, %v600
    %v1016 = vunpack.c.l.s4 1983009808
    %v1017 = vunpack.c.0.s8 %v1016
    %v1018 = vlaneseq
    %v1019 = vshrl.u32 %v1018, 7
    %v1020 = vsub.s32 %v1017, %v1019
    %v1021 = vrot.slane %v1014, %v1020
    %v1022 = vcombine.low %v795, %v1021
    %v1023 = vcombine.low %v599, %v601
    %v1024 = vcombine.low %v609, %v617
    %v1026 = vunpack.c.l.s4 1983009808
    %v1027 = vunpack.c.0.s8 %v1026
    %v1028 = vlaneseq
    %v1029 = vshrl.u32 %v1028, 7
    %v1030 = vsub.s32 %v1027, %v1029
    %v1031 = vrot.slane %v1023, %v1030
    %v1033 = vunpack.c.l.s4 1983009808
    %v1034 = vunpack.c.0.s8 %v1033
    %v1035 = vlaneseq
    %v1036 = vshrl.u32 %v1035, 7
    %v1037 = vsub.s32 %v1034, %v1036
    %v1038 = vrot.slane %v1024, %v1037
    %v1039 = vcombine.low %v1031, %v1038
    %v1040 = vcombine.low %v616, %v618
    %v1041 = vcombine.low %v625, %v626
    %v1043 = vunpack.c.l.s4 1983009808
    %v1044 = vunpack.c.0.s8 %v1043
    %v1045 = vlaneseq
    %v1046 = vshrl.u32 %v1045, 7
    %v1047 = vsub.s32 %v1044, %v1046
    %v1048 = vrot.slane %v1040, %v1047
    %v1050 = vunpack.c.l.s4 1983009808
    %v1051 = vunpack.c.0.s8 %v1050
    %v1052 = vlaneseq
    %v1053 = vshrl.u32 %v1052, 7
    %v1054 = vsub.s32 %v1051, %v1053
    %v1055 = vrot.slane %v1041, %v1054
    %v1056 = vcombine.low %v1048, %v1055
    %1057 = vrot.lane.b32.xlu0 %v1007, 32
    %v1058 = vpop.permute.xlu0 %1057
    %1059 = vrot.lane.b32.xlu0 %v1008, 32
    %v1060 = vpop.permute.xlu0 %1059
    %1061 = vrot.lane.b32.xlu0 %v1009, 32
    %v1062 = vpop.permute.xlu0 %1061
    %1063 = vrot.lane.b32.xlu0 %v1010, 32
    %v1064 = vpop.permute.xlu0 %1063
    %1065 = vrot.lane.b32.xlu0 %v1011, 32
    %v1066 = vpop.permute.xlu0 %1065
    %1067 = vrot.lane.b32.xlu0 %v1012, 32
    %v1068 = vpop.permute.xlu0 %1067
    %1069 = vrot.lane.b32.xlu0 %v1013, 32
    %v1070 = vpop.permute.xlu0 %1069
    %1071 = vrot.lane.b32.xlu0 %v1022, 32
    %v1072 = vpop.permute.xlu0 %1071
    %1073 = vrot.lane.b32.xlu0 %v1039, 32
    %v1074 = vpop.permute.xlu0 %1073
    %1075 = vrot.lane.b32.xlu0 %v1056, 32
    %v1076 = vpop.permute.xlu0 %1075
    %vm1087 = vcmask 130048
    %v1088 = vsel %vm1087, %v643, %v978
    %v1089 = vsel %vm1087, %v660, %v980
    %v1090 = vsel %vm1087, %v677, %v982
    %v1091 = vsel %vm1087, %v694, %v984
    %v1092 = vsel %vm1087, %v711, %v986
    %v1093 = vsel %vm1087, %v728, %v988
    %v1094 = vsel %vm1087, %v745, %v990
    %v1095 = vsel %vm1087, %v762, %v992
    %v1096 = vsel %vm1087, %v779, %v994
    %v1097 = vsel %vm1087, %v796, %v996
    %vm1098 = vcmask 261120
    %v1099 = vsel %vm1098, %v1088, %v1058
    %v1100 = vsel %vm1098, %v1089, %v1060
    %v1101 = vsel %vm1098, %v1090, %v1062
    %v1102 = vsel %vm1098, %v1091, %v1064
    %v1103 = vsel %vm1098, %v1092, %v1066
    %v1104 = vsel %vm1098, %v1093, %v1068
    %v1105 = vsel %vm1098, %v1094, %v1070
    %v1106 = vsel %vm1098, %v1095, %v1072
    %v1107 = vsel %vm1098, %v1096, %v1074
    %v1108 = vsel %vm1098, %v1097, %v1076
    %v1109 = vld [vmem:[%s3] sm:$0xff]
    %v1110 = vld [vmem:[%s3 + $0x8] sm:$0xff]
    %v1111 = vld [vmem:[%s3 + $0x10] sm:$0xff]
    %v1112 = vld [vmem:[%s3 + $0x18] sm:$0xff]
    %v1113 = vld [vmem:[%s3 + $0x20] sm:$0xff]
    %v1114 = vld [vmem:[%s3 + $0x28] sm:$0xff]
    %vm1115 = vcmask 392192
    %v1117 = vsel %vm1115, %v1099, 0
    %v1120 = vsel %vm1115, %v1100, 0
    %v1123 = vsel %vm1115, %v1101, 0
    %v1126 = vsel %vm1115, %v1102, 0
    %v1129 = vsel %vm1115, %v1103, 0
    %v1132 = vsel %vm1115, %v1104, 0
    %v1135 = vsel %vm1115, %v1105, 0
    %v1138 = vsel %vm1115, %v1106, 0
    %v1141 = vsel %vm1115, %v1107, 0
    %v1144 = vsel %vm1115, %v1108, 0
    %1146 = vmatprep.subr.mxu0 0.0
    %1147 = vmatpush1.msra.mxu0 %v1109
    %1148 = vmatprep.subr.mxu0 0.0
    %1149 = vmatpush1.msra.mxu0 %v1110
    %1150 = vmatprep.subr.mxu0 0.0
    %1151 = vmatpush1.msra.mxu0 %v1111
    %1152 = vmatprep.subr.mxu0 0.0
    %1153 = vmatpush1.msra.mxu0 %v1112
    %1154 = vmatprep.subr.mxu0 0.0
    %1155 = vmatpush1.msra.mxu0 %v1113
    %1156 = vmatprep.subr.mxu0 0.0
    %1157 = vmatpush1.msra.mxu0 %v1114
    %1158 = vmatprep.subr.mxu0 0.0
    %1159 = vmatpush1.msra.mxu0 0.0
    %1160 = vmatprep.subr.mxu0 0.0
    %1161 = vmatpush1.msra.mxu0 0.0
    %1162 = vmatprep.subr.mxu0 0.0
    %1163 = vmatpush1.msra.mxu0 0.0
    %1164 = vmatprep.subr.mxu0 0.0
    %1165 = vmatpush1.msra.mxu0 0.0
    %1166 = vmatprep.subr.mxu0 0.0
    %1167 = vmatpush1.msra.mxu0 0.0
    %1168 = vmatprep.subr.mxu0 0.0
    %1169 = vmatpush1.msra.mxu0 0.0
    %1170 = vmatprep.subr.mxu0 0.0
    %1171 = vmatpush1.msra.mxu0 0.0
    %1172 = vmatprep.subr.mxu0 0.0
    %1173 = vmatpush1.msra.mxu0 0.0
    %1174 = vmatprep.subr.mxu0 0.0
    %1175 = vmatpush1.msra.mxu0 0.0
    %1176 = vmatprep.subr.mxu0 0.0
    %1177 = vmatpush1.msra.mxu0 0.0
    %1178 = vmatprep.subr.mxu0 0.0
    %1179 = vmatpush1.msra.mxu0 0.0
    %1180 = vmatprep.subr.mxu0 0.0
    %1181 = vmatpush1.msra.mxu0 0.0
    %1182 = vmatprep.subr.mxu0 0.0
    %1183 = vmatpush1.msra.mxu0 0.0
    %1184 = vmatprep.subr.mxu0 0.0
    %1185 = vmatpush1.msra.mxu0 0.0
    %1186 = vmatprep.subr.mxu0 0.0
    %1187 = vmatpush1.msra.mxu0 0.0
    %1188 = vmatprep.subr.mxu0 0.0
    %1189 = vmatpush1.msra.mxu0 0.0
    %1190 = vmatprep.subr.mxu0 0.0
    %1191 = vmatpush1.msra.mxu0 0.0
    %1192 = vmatprep.subr.mxu0 0.0
    %1193 = vmatpush1.msra.mxu0 0.0
    %1194 = vmatprep.subr.mxu0 0.0
    %1195 = vmatpush1.msra.mxu0 0.0
    %1196 = vmatprep.subr.mxu0 0.0
    %1197 = vmatpush1.msra.mxu0 0.0
    %1198 = vmatprep.subr.mxu0 0.0
    %1199 = vmatpush1.msra.mxu0 0.0
    %1200 = vmatprep.subr.mxu0 0.0
    %1201 = vmatpush1.msra.mxu0 0.0
    %1202 = vmatprep.subr.mxu0 0.0
    %1203 = vmatpush1.msra.mxu0 0.0
    %1204 = vmatprep.subr.mxu0 0.0
    %1205 = vmatpush1.msra.mxu0 0.0
    %1206 = vmatprep.subr.mxu0 0.0
    %1207 = vmatpush1.msra.mxu0 0.0
    %1208 = vmatprep.subr.mxu0 0.0
    %1209 = vmatpush1.msra.mxu0 0.0
    %1210 = vmatprep.mubr.f32.mxu0 0.0
    %1211 = vmatmul.mubr.f32.gmra.mrb[0].mxu0 %v1117
    %v1212 = vpop.f32.mrb[0].mxu0
    %v1213 = vadd.f32 0.0, %v1212
    %v1214 = vpop.f32.mrb[0].mxu0
    %1215 = vmatprep.mubr.f32.mxu0 0.0
    %1216 = vmatmul.mubr.f32.gmra.mrb[0].mxu0 %v1120
    %v1217 = vpop.f32.mrb[0].mxu0
    %v1218 = vadd.f32 0.0, %v1217
    %v1219 = vpop.f32.mrb[0].mxu0
    %1220 = vmatprep.mubr.f32.mxu0 0.0
    %1221 = vmatmul.mubr.f32.gmra.mrb[0].mxu0 %v1123
    %v1222 = vpop.f32.mrb[0].mxu0
    %v1223 = vadd.f32 0.0, %v1222
    %v1224 = vpop.f32.mrb[0].mxu0
    %1225 = vmatprep.mubr.f32.mxu0 0.0
    %1226 = vmatmul.mubr.f32.gmra.mrb[0].mxu0 %v1126
    %v1227 = vpop.f32.mrb[0].mxu0
    %v1228 = vadd.f32 0.0, %v1227
    %v1229 = vpop.f32.mrb[0].mxu0
    %1230 = vmatprep.mubr.f32.mxu0 0.0
    %1231 = vmatmul.mubr.f32.gmra.mrb[0].mxu0 %v1129
    %v1232 = vpop.f32.mrb[0].mxu0
    %v1233 = vadd.f32 0.0, %v1232
    %v1234 = vpop.f32.mrb[0].mxu0
    %1235 = vmatprep.mubr.f32.mxu0 0.0
    %1236 = vmatmul.mubr.f32.gmra.mrb[0].mxu0 %v1132
    %v1237 = vpop.f32.mrb[0].mxu0
    %v1238 = vadd.f32 0.0, %v1237
    %v1239 = vpop.f32.mrb[0].mxu0
    %1240 = vmatprep.mubr.f32.mxu0 0.0
    %1241 = vmatmul.mubr.f32.gmra.mrb[0].mxu0 %v1135
    %v1242 = vpop.f32.mrb[0].mxu0
    %v1243 = vadd.f32 0.0, %v1242
    %v1244 = vpop.f32.mrb[0].mxu0
    %1245 = vmatprep.mubr.f32.mxu0 0.0
    %1246 = vmatmul.mubr.f32.gmra.mrb[0].mxu0 %v1138
    %v1247 = vpop.f32.mrb[0].mxu0
    %v1248 = vadd.f32 0.0, %v1247
    %v1249 = vpop.f32.mrb[0].mxu0
    %1250 = vmatprep.mubr.f32.mxu0 0.0
    %1251 = vmatmul.mubr.f32.gmra.mrb[0].mxu0 %v1141
    %v1252 = vpop.f32.mrb[0].mxu0
    %v1253 = vadd.f32 0.0, %v1252
    %v1254 = vpop.f32.mrb[0].mxu0
    %1255 = vmatprep.mubr.f32.mxu0 0.0
    %1256 = vmatmul.mubr.f32.gmra.mrb[0].mxu0 %v1144
    %v1257 = vpop.f32.mrb[0].mxu0
    %v1258 = vadd.f32 0.0, %v1257
    %v1259 = vpop.f32.mrb[0].mxu0
    %1260 = vdwg.mxu0
    %v1271 = vcombine.high %v1213, %v1213
    %v1273 = vunpack.c.l.s4 1983009808
    %v1274 = vunpack.c.0.s8 %v1273
    %v1275 = vlaneseq
    %v1276 = vshrl.u32 %v1275, 7
    %v1277 = vsub.s32 %v1274, %v1276
    %v1278 = vrot.slane %v1213, %v1277
    %v1280 = vunpack.c.l.s4 1983009808
    %v1281 = vunpack.c.0.s8 %v1280
    %v1282 = vlaneseq
    %v1283 = vshrl.u32 %v1282, 7
    %v1284 = vsub.s32 %v1281, %v1283
    %v1285 = vrot.slane %v1271, %v1284
    %v1286 = vcombine.high %v1278, %v1278
    %v1287 = vcombine.high %v1285, %v1285
    %v1288 = vcombine.high %v1218, %v1218
    %v1290 = vunpack.c.l.s4 1983009808
    %v1291 = vunpack.c.0.s8 %v1290
    %v1292 = vlaneseq
    %v1293 = vshrl.u32 %v1292, 7
    %v1294 = vsub.s32 %v1291, %v1293
    %v1295 = vrot.slane %v1218, %v1294
    %v1297 = vunpack.c.l.s4 1983009808
    %v1298 = vunpack.c.0.s8 %v1297
    %v1299 = vlaneseq
    %v1300 = vshrl.u32 %v1299, 7
    %v1301 = vsub.s32 %v1298, %v1300
    %v1302 = vrot.slane %v1288, %v1301
    %v1303 = vcombine.high %v1295, %v1295
    %v1304 = vcombine.high %v1302, %v1302
    %v1305 = vcombine.high %v1223, %v1223
    %v1307 = vunpack.c.l.s4 1983009808
    %v1308 = vunpack.c.0.s8 %v1307
    %v1309 = vlaneseq
    %v1310 = vshrl.u32 %v1309, 7
    %v1311 = vsub.s32 %v1308, %v1310
    %v1312 = vrot.slane %v1223, %v1311
    %v1314 = vunpack.c.l.s4 1983009808
    %v1315 = vunpack.c.0.s8 %v1314
    %v1316 = vlaneseq
    %v1317 = vshrl.u32 %v1316, 7
    %v1318 = vsub.s32 %v1315, %v1317
    %v1319 = vrot.slane %v1305, %v1318
    %v1320 = vcombine.high %v1312, %v1312
    %v1321 = vcombine.high %v1319, %v1319
    %v1322 = vcombine.high %v1228, %v1228
    %v1324 = vunpack.c.l.s4 1983009808
    %v1325 = vunpack.c.0.s8 %v1324
    %v1326 = vlaneseq
    %v1327 = vshrl.u32 %v1326, 7
    %v1328 = vsub.s32 %v1325, %v1327
    %v1329 = vrot.slane %v1228, %v1328
    %v1331 = vunpack.c.l.s4 1983009808
    %v1332 = vunpack.c.0.s8 %v1331
    %v1333 = vlaneseq
    %v1334 = vshrl.u32 %v1333, 7
    %v1335 = vsub.s32 %v1332, %v1334
    %v1336 = vrot.slane %v1322, %v1335
    %v1337 = vcombine.high %v1329, %v1329
    %v1338 = vcombine.high %v1336, %v1336
    %v1339 = vcombine.high %v1233, %v1233
    %v1341 = vunpack.c.l.s4 1983009808
    %v1342 = vunpack.c.0.s8 %v1341
    %v1343 = vlaneseq
    %v1344 = vshrl.u32 %v1343, 7
    %v1345 = vsub.s32 %v1342, %v1344
    %v1346 = vrot.slane %v1233, %v1345
    %v1348 = vunpack.c.l.s4 1983009808
    %v1349 = vunpack.c.0.s8 %v1348
    %v1350 = vlaneseq
    %v1351 = vshrl.u32 %v1350, 7
    %v1352 = vsub.s32 %v1349, %v1351
    %v1353 = vrot.slane %v1339, %v1352
    %v1354 = vcombine.high %v1346, %v1346
    %v1355 = vcombine.high %v1353, %v1353
    %v1356 = vcombine.high %v1238, %v1238
    %v1358 = vunpack.c.l.s4 1983009808
    %v1359 = vunpack.c.0.s8 %v1358
    %v1360 = vlaneseq
    %v1361 = vshrl.u32 %v1360, 7
    %v1362 = vsub.s32 %v1359, %v1361
    %v1363 = vrot.slane %v1238, %v1362
    %v1365 = vunpack.c.l.s4 1983009808
    %v1366 = vunpack.c.0.s8 %v1365
    %v1367 = vlaneseq
    %v1368 = vshrl.u32 %v1367, 7
    %v1369 = vsub.s32 %v1366, %v1368
    %v1370 = vrot.slane %v1356, %v1369
    %v1371 = vcombine.high %v1363, %v1363
    %v1372 = vcombine.high %v1370, %v1370
    %v1373 = vcombine.high %v1243, %v1243
    %v1375 = vunpack.c.l.s4 1983009808
    %v1376 = vunpack.c.0.s8 %v1375
    %v1377 = vlaneseq
    %v1378 = vshrl.u32 %v1377, 7
    %v1379 = vsub.s32 %v1376, %v1378
    %v1380 = vrot.slane %v1243, %v1379
    %v1382 = vunpack.c.l.s4 1983009808
    %v1383 = vunpack.c.0.s8 %v1382
    %v1384 = vlaneseq
    %v1385 = vshrl.u32 %v1384, 7
    %v1386 = vsub.s32 %v1383, %v1385
    %v1387 = vrot.slane %v1373, %v1386
    %v1388 = vcombine.high %v1380, %v1380
    %v1389 = vcombine.high %v1387, %v1387
    %v1390 = vcombine.high %v1248, %v1248
    %v1392 = vunpack.c.l.s4 1983009808
    %v1393 = vunpack.c.0.s8 %v1392
    %v1394 = vlaneseq
    %v1395 = vshrl.u32 %v1394, 7
    %v1396 = vsub.s32 %v1393, %v1395
    %v1397 = vrot.slane %v1248, %v1396
    %v1399 = vunpack.c.l.s4 1983009808
    %v1400 = vunpack.c.0.s8 %v1399
    %v1401 = vlaneseq
    %v1402 = vshrl.u32 %v1401, 7
    %v1403 = vsub.s32 %v1400, %v1402
    %v1404 = vrot.slane %v1390, %v1403
    %v1405 = vcombine.high %v1397, %v1397
    %v1406 = vcombine.high %v1404, %v1404
    %v1407 = vcombine.high %v1253, %v1253
    %v1409 = vunpack.c.l.s4 1983009808
    %v1410 = vunpack.c.0.s8 %v1409
    %v1411 = vlaneseq
    %v1412 = vshrl.u32 %v1411, 7
    %v1413 = vsub.s32 %v1410, %v1412
    %v1414 = vrot.slane %v1253, %v1413
    %v1416 = vunpack.c.l.s4 1983009808
    %v1417 = vunpack.c.0.s8 %v1416
    %v1418 = vlaneseq
    %v1419 = vshrl.u32 %v1418, 7
    %v1420 = vsub.s32 %v1417, %v1419
    %v1421 = vrot.slane %v1407, %v1420
    %v1422 = vcombine.high %v1414, %v1414
    %v1423 = vcombine.high %v1421, %v1421
    %v1424 = vcombine.high %v1258, %v1258
    %v1426 = vunpack.c.l.s4 1983009808
    %v1427 = vunpack.c.0.s8 %v1426
    %v1428 = vlaneseq
    %v1429 = vshrl.u32 %v1428, 7
    %v1430 = vsub.s32 %v1427, %v1429
    %v1431 = vrot.slane %v1258, %v1430
    %v1433 = vunpack.c.l.s4 1983009808
    %v1434 = vunpack.c.0.s8 %v1433
    %v1435 = vlaneseq
    %v1436 = vshrl.u32 %v1435, 7
    %v1437 = vsub.s32 %v1434, %v1436
    %v1438 = vrot.slane %v1424, %v1437
    %v1439 = vcombine.high %v1431, %v1431
    %v1440 = vcombine.high %v1438, %v1438
    %vm1481 = vcmask 58368
    %v1482 = vsel %vm1481, %v1278, -inf
    %v1483 = vsel %vm1481, %v1303, -inf
    %v1484 = vmax.f32 %v1482, %v1483
    %v1485 = vsel %vm1481, %v1319, -inf
    %v1486 = vmax.f32 %v1484, %v1485
    %v1487 = vsel %vm1481, %v1338, -inf
    %v1488 = vmax.f32 %v1486, %v1487
    %v1489 = vsel %vm1481, %v1363, -inf
    %v1490 = vmax.f32 %v1488, %v1489
    %v1491 = vsel %vm1481, %v1388, -inf
    %v1492 = vmax.f32 %v1490, %v1491
    %v1493 = vsel %vm1481, %v1404, -inf
    %v1494 = vmax.f32 %v1492, %v1493
    %v1495 = vsel %vm1481, %v1423, -inf
    %v1496 = vmax.f32 %v1494, %v1495
    %v1497 = vsel %vm1481, %v1286, -inf
    %v1498 = vsel %vm1481, %v1302, -inf
    %v1499 = vmax.f32 %v1497, %v1498
    %v1500 = vsel %vm1481, %v1321, -inf
    %v1501 = vmax.f32 %v1499, %v1500
    %v1502 = vsel %vm1481, %v1346, -inf
    %v1503 = vmax.f32 %v1501, %v1502
    %v1504 = vsel %vm1481, %v1371, -inf
    %v1505 = vmax.f32 %v1503, %v1504
    %v1506 = vsel %vm1481, %v1387, -inf
    %v1507 = vmax.f32 %v1505, %v1506
    %v1508 = vsel %vm1481, %v1406, -inf
    %v1509 = vmax.f32 %v1507, %v1508
    %v1510 = vsel %vm1481, %v1431, -inf
    %v1511 = vmax.f32 %v1509, %v1510
    %v1512 = vsel %vm1481, %v1285, -inf
    %v1513 = vsel %vm1481, %v1304, -inf
    %v1514 = vmax.f32 %v1512, %v1513
    %v1515 = vsel %vm1481, %v1329, -inf
    %v1516 = vmax.f32 %v1514, %v1515
    %v1517 = vsel %vm1481, %v1354, -inf
    %v1518 = vmax.f32 %v1516, %v1517
    %v1519 = vsel %vm1481, %v1370, -inf
    %v1520 = vmax.f32 %v1518, %v1519
    %v1521 = vsel %vm1481, %v1389, -inf
    %v1522 = vmax.f32 %v1520, %v1521
    %v1523 = vsel %vm1481, %v1414, -inf
    %v1524 = vmax.f32 %v1522, %v1523
    %v1525 = vsel %vm1481, %v1439, -inf
    %v1526 = vmax.f32 %v1524, %v1525
    %v1527 = vsel %vm1481, %v1287, -inf
    %v1528 = vsel %vm1481, %v1312, -inf
    %v1529 = vmax.f32 %v1527, %v1528
    %v1530 = vsel %vm1481, %v1337, -inf
    %v1531 = vmax.f32 %v1529, %v1530
    %v1532 = vsel %vm1481, %v1353, -inf
    %v1533 = vmax.f32 %v1531, %v1532
    %v1534 = vsel %vm1481, %v1372, -inf
    %v1535 = vmax.f32 %v1533, %v1534
    %v1536 = vsel %vm1481, %v1397, -inf
    %v1537 = vmax.f32 %v1535, %v1536
    %v1538 = vsel %vm1481, %v1422, -inf
    %v1539 = vmax.f32 %v1537, %v1538
    %v1540 = vsel %vm1481, %v1438, -inf
    %v1541 = vmax.f32 %v1539, %v1540
    %v1542 = vsel %vm1481, %v1295, -inf
    %v1543 = vsel %vm1481, %v1320, -inf
    %v1544 = vmax.f32 %v1542, %v1543
    %v1545 = vsel %vm1481, %v1336, -inf
    %v1546 = vmax.f32 %v1544, %v1545
    %v1547 = vsel %vm1481, %v1355, -inf
    %v1548 = vmax.f32 %v1546, %v1547
    %v1549 = vsel %vm1481, %v1380, -inf
    %v1550 = vmax.f32 %v1548, %v1549
    %v1551 = vsel %vm1481, %v1405, -inf
    %v1552 = vmax.f32 %v1550, %v1551
    %v1553 = vsel %vm1481, %v1421, -inf
    %v1554 = vmax.f32 %v1552, %v1553
    %v1555 = vsel %vm1481, %v1440, -inf
    %v1556 = vmax.f32 %v1554, %v1555
    %v1558 = vlaneseq
    %v1559 = vshrl.u32 %v1558, 7
    %v1560 = vsub.s32 0, %v1559
    %v1561 = vrot.slane %v27, %v1560
    %v1562 = vcombine.high %v1561, %v1561
    %v1564 = vunpack.c.l.s4 1983009808
    %v1565 = vunpack.c.0.s8 %v1564
    %v1566 = vlaneseq
    %v1567 = vshrl.u32 %v1566, 7
    %v1568 = vsub.s32 %v1565, %v1567
    %v1569 = vrot.slane %v1561, %v1568
    %v1571 = vunpack.c.l.s4 1983009808
    %v1572 = vunpack.c.0.s8 %v1571
    %v1573 = vlaneseq
    %v1574 = vshrl.u32 %v1573, 7
    %v1575 = vsub.s32 %v1572, %v1574
    %v1576 = vrot.slane %v1562, %v1575
    %v1577 = vcombine.high %v1569, %v1569
    %v1578 = vcombine.high %v1576, %v1576
    %v1583 = vadd.f32 %v1496, %v1569
    %v1584 = vadd.f32 %v1511, %v1577
    %v1585 = vadd.f32 %v1526, %v1576
    %v1586 = vadd.f32 %v1541, %v1578
    %v1587 = vadd.f32 %v1556, %v1569
    %v1593 = vcombine.low %v1583, %v1584
    %v1594 = vcombine.low %v1585, %v1586
    %v1596 = vunpack.c.l.s4 1983009808
    %v1597 = vunpack.c.0.s8 %v1596
    %v1598 = vlaneseq
    %v1599 = vshrl.u32 %v1598, 7
    %v1600 = vsub.s32 %v1597, %v1599
    %v1601 = vrot.slane %v1593, %v1600
    %v1603 = vunpack.c.l.s4 1983009808
    %v1604 = vunpack.c.0.s8 %v1603
    %v1605 = vlaneseq
    %v1606 = vshrl.u32 %v1605, 7
    %v1607 = vsub.s32 %v1604, %v1606
    %v1608 = vrot.slane %v1594, %v1607
    %v1609 = vcombine.low %v1601, %v1608
    %v1611 = vunpack.c.l.s4 1983009808
    %v1612 = vunpack.c.0.s8 %v1611
    %v1613 = vlaneseq
    %v1614 = vshrl.u32 %v1613, 7
    %v1615 = vsub.s32 %v1612, %v1614
    %v1616 = vrot.slane %v1587, %v1615
    %1617 = vrot.lane.b32.xlu0 %v1609, 32
    %v1618 = vpop.permute.xlu0 %1617
    %1619 = vrot.lane.b32.xlu0 %v1616, 32
    %v1620 = vpop.permute.xlu0 %1619
    %v1623 = vsel %vm1098, %v126, %v1618
    %v1624 = vsel %vm1098, %v131, %v1620
    %v1627 = vcombine.high %v1623, %v1623
    %v1629 = vunpack.c.l.s4 1983009808
    %v1630 = vunpack.c.0.s8 %v1629
    %v1631 = vlaneseq
    %v1632 = vshrl.u32 %v1631, 7
    %v1633 = vsub.s32 %v1630, %v1632
    %v1634 = vrot.slane %v1623, %v1633
    %v1636 = vunpack.c.l.s4 1983009808
    %v1637 = vunpack.c.0.s8 %v1636
    %v1638 = vlaneseq
    %v1639 = vshrl.u32 %v1638, 7
    %v1640 = vsub.s32 %v1637, %v1639
    %v1641 = vrot.slane %v1627, %v1640
    %v1642 = vcombine.high %v1634, %v1634
    %v1643 = vcombine.high %v1641, %v1641
    %v1645 = vunpack.c.l.s4 1983009808
    %v1646 = vunpack.c.0.s8 %v1645
    %v1647 = vlaneseq
    %v1648 = vshrl.u32 %v1647, 7
    %v1649 = vsub.s32 %v1646, %v1648
    %v1650 = vrot.slane %v1624, %v1649
    %v1651 = vld [vmem:[%s4] sm:$0xff]
    %v1652 = vld [vmem:[%s4 + $0x8] sm:$0xff]
    %v1653 = vld [vmem:[%s4 + $0x10] sm:$0xff]
    %v1654 = vld [vmem:[%s4 + $0x18] sm:$0xff]
    %v1655 = vld [vmem:[%s4 + $0x20] sm:$0xff]
    %v1656 = vld [vmem:[%s4 + $0x28] sm:$0xff]
    %v1657 = vld [vmem:[%s4 + $0x30] sm:$0xff]
    %v1658 = vld [vmem:[%s4 + $0x38] sm:$0xff]
    %v1659 = vld [vmem:[%s4 + $0x40] sm:$0xff]
    %v1660 = vld [vmem:[%s4 + $0x48] sm:$0xff]
    %v1661 = vld [vmem:[%s4 + $0x50] sm:$0xff]
    %v1662 = vld [vmem:[%s4 + $0x58] sm:$0xff]
    %v1663 = vld [vmem:[%s4 + $0x60] sm:$0xff]
    %v1664 = vld [vmem:[%s4 + $0x68] sm:$0xff]
    %v1665 = vld [vmem:[%s4 + $0x70] sm:$0xff]
    %v1666 = vld [vmem:[%s4 + $0x78] sm:$0xff]
    %v1667 = vld [vmem:[%s4 + $0x80] sm:$0xff]
    %v1668 = vld [vmem:[%s4 + $0x88] sm:$0xff]
    %v1669 = vld [vmem:[%s4 + $0x90] sm:$0xff]
    %v1670 = vld [vmem:[%s4 + $0x98] sm:$0xff]
    %v1671 = vld [vmem:[%s4 + $0xa0] sm:$0xff]
    %v1672 = vld [vmem:[%s4 + $0xa8] sm:$0xff]
    %v1673 = vld [vmem:[%s4 + $0xb0] sm:$0xff]
    %v1674 = vld [vmem:[%s4 + $0xb8] sm:$0xff]
    %v1675 = vld [vmem:[%s4 + $0xc0] sm:$0xff]
    %vm1676 = vcmask 326656
    %v1677 = vsel %vm1676, %v1634, 0
    %1679 = vmatprep.subr.mxu0 0.0
    %1680 = vmatpush1.msra.mxu0 %v1651
    %1681 = vmatprep.subr.mxu0 0.0
    %1682 = vmatpush1.msra.mxu0 %v1652
    %1683 = vmatprep.subr.mxu0 0.0
    %1684 = vmatpush1.msra.mxu0 %v1653
    %1685 = vmatprep.subr.mxu0 0.0
    %1686 = vmatpush1.msra.mxu0 %v1654
    %1687 = vmatprep.subr.mxu0 0.0
    %1688 = vmatpush1.msra.mxu0 %v1655
    %1689 = vmatprep.subr.mxu0 0.0
    %1690 = vmatpush1.msra.mxu0 0.0
    %1691 = vmatprep.subr.mxu0 0.0
    %1692 = vmatpush1.msra.mxu0 0.0
    %1693 = vmatprep.subr.mxu0 0.0
    %1694 = vmatpush1.msra.mxu0 0.0
    %1695 = vmatprep.subr.mxu0 0.0
    %1696 = vmatpush1.msra.mxu0 0.0
    %1697 = vmatprep.subr.mxu0 0.0
    %1698 = vmatpush1.msra.mxu0 0.0
    %1699 = vmatprep.subr.mxu0 0.0
    %1700 = vmatpush1.msra.mxu0 0.0
    %1701 = vmatprep.subr.mxu0 0.0
    %1702 = vmatpush1.msra.mxu0 0.0
    %1703 = vmatprep.subr.mxu0 0.0
    %1704 = vmatpush1.msra.mxu0 0.0
    %1705 = vmatprep.subr.mxu0 0.0
    %1706 = vmatpush1.msra.mxu0 0.0
    %1707 = vmatprep.subr.mxu0 0.0
    %1708 = vmatpush1.msra.mxu0 0.0
    %1709 = vmatprep.subr.mxu0 0.0
    %1710 = vmatpush1.msra.mxu0 0.0
    %1711 = vmatprep.subr.mxu0 0.0
    %1712 = vmatpush1.msra.mxu0 0.0
    %1713 = vmatprep.subr.mxu0 0.0
    %1714 = vmatpush1.msra.mxu0 0.0
    %1715 = vmatprep.subr.mxu0 0.0
    %1716 = vmatpush1.msra.mxu0 0.0
    %1717 = vmatprep.subr.mxu0 0.0
    %1718 = vmatpush1.msra.mxu0 0.0
    %1719 = vmatprep.subr.mxu0 0.0
    %1720 = vmatpush1.msra.mxu0 0.0
    %1721 = vmatprep.subr.mxu0 0.0
    %1722 = vmatpush1.msra.mxu0 0.0
    %1723 = vmatprep.subr.mxu0 0.0
    %1724 = vmatpush1.msra.mxu0 0.0
    %1725 = vmatprep.subr.mxu0 0.0
    %1726 = vmatpush1.msra.mxu0 0.0
    %1727 = vmatprep.subr.mxu0 0.0
    %1728 = vmatpush1.msra.mxu0 0.0
    %1729 = vmatprep.subr.mxu0 0.0
    %1730 = vmatpush1.msra.mxu0 0.0
    %1731 = vmatprep.subr.mxu0 0.0
    %1732 = vmatpush1.msra.mxu0 0.0
    %1733 = vmatprep.subr.mxu0 0.0
    %1734 = vmatpush1.msra.mxu0 0.0
    %1735 = vmatprep.subr.mxu0 0.0
    %1736 = vmatpush1.msra.mxu0 0.0
    %1737 = vmatprep.subr.mxu0 0.0
    %1738 = vmatpush1.msra.mxu0 0.0
    %1739 = vmatprep.subr.mxu0 0.0
    %1740 = vmatpush1.msra.mxu0 0.0
    %1741 = vmatprep.subr.mxu0 0.0
    %1742 = vmatpush1.msra.mxu0 0.0
    %1743 = vmatprep.mubr.f32.mxu0 0.0
    %1744 = vmatmul.mubr.f32.gmra.mrb[0].mxu0 %v1677
    %v1745 = vpop.f32.mrb[0].mxu0
    %v1746 = vadd.f32 0.0, %v1745
    %v1747 = vpop.f32.mrb[0].mxu0
    %1748 = vdwg.mxu0
    %v1749 = vsel %vm1676, %v1642, 0
    %1751 = vmatprep.subr.mxu0 0.0
    %1752 = vmatpush1.msra.mxu0 %v1656
    %1753 = vmatprep.subr.mxu0 0.0
    %1754 = vmatpush1.msra.mxu0 %v1657
    %1755 = vmatprep.subr.mxu0 0.0
    %1756 = vmatpush1.msra.mxu0 %v1658
    %1757 = vmatprep.subr.mxu0 0.0
    %1758 = vmatpush1.msra.mxu0 %v1659
    %1759 = vmatprep.subr.mxu0 0.0
    %1760 = vmatpush1.msra.mxu0 %v1660
    %1761 = vmatprep.subr.mxu0 0.0
    %1762 = vmatpush1.msra.mxu0 0.0
    %1763 = vmatprep.subr.mxu0 0.0
    %1764 = vmatpush1.msra.mxu0 0.0
    %1765 = vmatprep.subr.mxu0 0.0
    %1766 = vmatpush1.msra.mxu0 0.0
    %1767 = vmatprep.subr.mxu0 0.0
    %1768 = vmatpush1.msra.mxu0 0.0
    %1769 = vmatprep.subr.mxu0 0.0
    %1770 = vmatpush1.msra.mxu0 0.0
    %1771 = vmatprep.subr.mxu0 0.0
    %1772 = vmatpush1.msra.mxu0 0.0
    %1773 = vmatprep.subr.mxu0 0.0
    %1774 = vmatpush1.msra.mxu0 0.0
    %1775 = vmatprep.subr.mxu0 0.0
    %1776 = vmatpush1.msra.mxu0 0.0
    %1777 = vmatprep.subr.mxu0 0.0
    %1778 = vmatpush1.msra.mxu0 0.0
    %1779 = vmatprep.subr.mxu0 0.0
    %1780 = vmatpush1.msra.mxu0 0.0
    %1781 = vmatprep.subr.mxu0 0.0
    %1782 = vmatpush1.msra.mxu0 0.0
    %1783 = vmatprep.subr.mxu0 0.0
    %1784 = vmatpush1.msra.mxu0 0.0
    %1785 = vmatprep.subr.mxu0 0.0
    %1786 = vmatpush1.msra.mxu0 0.0
    %1787 = vmatprep.subr.mxu0 0.0
    %1788 = vmatpush1.msra.mxu0 0.0
    %1789 = vmatprep.subr.mxu0 0.0
    %1790 = vmatpush1.msra.mxu0 0.0
    %1791 = vmatprep.subr.mxu0 0.0
    %1792 = vmatpush1.msra.mxu0 0.0
    %1793 = vmatprep.subr.mxu0 0.0
    %1794 = vmatpush1.msra.mxu0 0.0
    %1795 = vmatprep.subr.mxu0 0.0
    %1796 = vmatpush1.msra.mxu0 0.0
    %1797 = vmatprep.subr.mxu0 0.0
    %1798 = vmatpush1.msra.mxu0 0.0
    %1799 = vmatprep.subr.mxu0 0.0
    %1800 = vmatpush1.msra.mxu0 0.0
    %1801 = vmatprep.subr.mxu0 0.0
    %1802 = vmatpush1.msra.mxu0 0.0
    %1803 = vmatprep.subr.mxu0 0.0
    %1804 = vmatpush1.msra.mxu0 0.0
    %1805 = vmatprep.subr.mxu0 0.0
    %1806 = vmatpush1.msra.mxu0 0.0
    %1807 = vmatprep.subr.mxu0 0.0
    %1808 = vmatpush1.msra.mxu0 0.0
    %1809 = vmatprep.subr.mxu0 0.0
    %1810 = vmatpush1.msra.mxu0 0.0
    %1811 = vmatprep.subr.mxu0 0.0
    %1812 = vmatpush1.msra.mxu0 0.0
    %1813 = vmatprep.subr.mxu0 0.0
    %1814 = vmatpush1.msra.mxu0 0.0
    %1815 = vmatprep.mubr.f32.mxu0 0.0
    %1816 = vmatmul.mubr.f32.gmra.mrb[0].mxu0 %v1749
    %v1817 = vpop.f32.mrb[0].mxu0
    %v1818 = vadd.f32 0.0, %v1817
    %v1819 = vpop.f32.mrb[0].mxu0
    %1820 = vdwg.mxu0
    %v1821 = vsel %vm1676, %v1641, 0
    %1823 = vmatprep.subr.mxu0 0.0
    %1824 = vmatpush1.msra.mxu0 %v1661
    %1825 = vmatprep.subr.mxu0 0.0
    %1826 = vmatpush1.msra.mxu0 %v1662
    %1827 = vmatprep.subr.mxu0 0.0
    %1828 = vmatpush1.msra.mxu0 %v1663
    %1829 = vmatprep.subr.mxu0 0.0
    %1830 = vmatpush1.msra.mxu0 %v1664
    %1831 = vmatprep.subr.mxu0 0.0
    %1832 = vmatpush1.msra.mxu0 %v1665
    %1833 = vmatprep.subr.mxu0 0.0
    %1834 = vmatpush1.msra.mxu0 0.0
    %1835 = vmatprep.subr.mxu0 0.0
    %1836 = vmatpush1.msra.mxu0 0.0
    %1837 = vmatprep.subr.mxu0 0.0
    %1838 = vmatpush1.msra.mxu0 0.0
    %1839 = vmatprep.subr.mxu0 0.0
    %1840 = vmatpush1.msra.mxu0 0.0
    %1841 = vmatprep.subr.mxu0 0.0
    %1842 = vmatpush1.msra.mxu0 0.0
    %1843 = vmatprep.subr.mxu0 0.0
    %1844 = vmatpush1.msra.mxu0 0.0
    %1845 = vmatprep.subr.mxu0 0.0
    %1846 = vmatpush1.msra.mxu0 0.0
    %1847 = vmatprep.subr.mxu0 0.0
    %1848 = vmatpush1.msra.mxu0 0.0
    %1849 = vmatprep.subr.mxu0 0.0
    %1850 = vmatpush1.msra.mxu0 0.0
    %1851 = vmatprep.subr.mxu0 0.0
    %1852 = vmatpush1.msra.mxu0 0.0
    %1853 = vmatprep.subr.mxu0 0.0
    %1854 = vmatpush1.msra.mxu0 0.0
    %1855 = vmatprep.subr.mxu0 0.0
    %1856 = vmatpush1.msra.mxu0 0.0
    %1857 = vmatprep.subr.mxu0 0.0
    %1858 = vmatpush1.msra.mxu0 0.0
    %1859 = vmatprep.subr.mxu0 0.0
    %1860 = vmatpush1.msra.mxu0 0.0
    %1861 = vmatprep.subr.mxu0 0.0
    %1862 = vmatpush1.msra.mxu0 0.0
    %1863 = vmatprep.subr.mxu0 0.0
    %1864 = vmatpush1.msra.mxu0 0.0
    %1865 = vmatprep.subr.mxu0 0.0
    %1866 = vmatpush1.msra.mxu0 0.0
    %1867 = vmatprep.subr.mxu0 0.0
    %1868 = vmatpush1.msra.mxu0 0.0
    %1869 = vmatprep.subr.mxu0 0.0
    %1870 = vmatpush1.msra.mxu0 0.0
    %1871 = vmatprep.subr.mxu0 0.0
    %1872 = vmatpush1.msra.mxu0 0.0
    %1873 = vmatprep.subr.mxu0 0.0
    %1874 = vmatpush1.msra.mxu0 0.0
    %1875 = vmatprep.subr.mxu0 0.0
    %1876 = vmatpush1.msra.mxu0 0.0
    %1877 = vmatprep.subr.mxu0 0.0
    %1878 = vmatpush1.msra.mxu0 0.0
    %1879 = vmatprep.subr.mxu0 0.0
    %1880 = vmatpush1.msra.mxu0 0.0
    %1881 = vmatprep.subr.mxu0 0.0
    %1882 = vmatpush1.msra.mxu0 0.0
    %1883 = vmatprep.subr.mxu0 0.0
    %1884 = vmatpush1.msra.mxu0 0.0
    %1885 = vmatprep.subr.mxu0 0.0
    %1886 = vmatpush1.msra.mxu0 0.0
    %1887 = vmatprep.mubr.f32.mxu0 0.0
    %1888 = vmatmul.mubr.f32.gmra.mrb[0].mxu0 %v1821
    %v1889 = vpop.f32.mrb[0].mxu0
    %v1890 = vadd.f32 0.0, %v1889
    %v1891 = vpop.f32.mrb[0].mxu0
    %1892 = vdwg.mxu0
    %v1893 = vsel %vm1676, %v1643, 0
    %1895 = vmatprep.subr.mxu0 0.0
    %1896 = vmatpush1.msra.mxu0 %v1666
    %1897 = vmatprep.subr.mxu0 0.0
    %1898 = vmatpush1.msra.mxu0 %v1667
    %1899 = vmatprep.subr.mxu0 0.0
    %1900 = vmatpush1.msra.mxu0 %v1668
    %1901 = vmatprep.subr.mxu0 0.0
    %1902 = vmatpush1.msra.mxu0 %v1669
    %1903 = vmatprep.subr.mxu0 0.0
    %1904 = vmatpush1.msra.mxu0 %v1670
    %1905 = vmatprep.subr.mxu0 0.0
    %1906 = vmatpush1.msra.mxu0 0.0
    %1907 = vmatprep.subr.mxu0 0.0
    %1908 = vmatpush1.msra.mxu0 0.0
    %1909 = vmatprep.subr.mxu0 0.0
    %1910 = vmatpush1.msra.mxu0 0.0
    %1911 = vmatprep.subr.mxu0 0.0
    %1912 = vmatpush1.msra.mxu0 0.0
    %1913 = vmatprep.subr.mxu0 0.0
    %1914 = vmatpush1.msra.mxu0 0.0
    %1915 = vmatprep.subr.mxu0 0.0
    %1916 = vmatpush1.msra.mxu0 0.0
    %1917 = vmatprep.subr.mxu0 0.0
    %1918 = vmatpush1.msra.mxu0 0.0
    %1919 = vmatprep.subr.mxu0 0.0
    %1920 = vmatpush1.msra.mxu0 0.0
    %1921 = vmatprep.subr.mxu0 0.0
    %1922 = vmatpush1.msra.mxu0 0.0
    %1923 = vmatprep.subr.mxu0 0.0
    %1924 = vmatpush1.msra.mxu0 0.0
    %1925 = vmatprep.subr.mxu0 0.0
    %1926 = vmatpush1.msra.mxu0 0.0
    %1927 = vmatprep.subr.mxu0 0.0
    %1928 = vmatpush1.msra.mxu0 0.0
    %1929 = vmatprep.subr.mxu0 0.0
    %1930 = vmatpush1.msra.mxu0 0.0
    %1931 = vmatprep.subr.mxu0 0.0
    %1932 = vmatpush1.msra.mxu0 0.0
    %1933 = vmatprep.subr.mxu0 0.0
    %1934 = vmatpush1.msra.mxu0 0.0
    %1935 = vmatprep.subr.mxu0 0.0
    %1936 = vmatpush1.msra.mxu0 0.0
    %1937 = vmatprep.subr.mxu0 0.0
    %1938 = vmatpush1.msra.mxu0 0.0
    %1939 = vmatprep.subr.mxu0 0.0
    %1940 = vmatpush1.msra.mxu0 0.0
    %1941 = vmatprep.subr.mxu0 0.0
    %1942 = vmatpush1.msra.mxu0 0.0
    %1943 = vmatprep.subr.mxu0 0.0
    %1944 = vmatpush1.msra.mxu0 0.0
    %1945 = vmatprep.subr.mxu0 0.0
    %1946 = vmatpush1.msra.mxu0 0.0
    %1947 = vmatprep.subr.mxu0 0.0
    %1948 = vmatpush1.msra.mxu0 0.0
    %1949 = vmatprep.subr.mxu0 0.0
    %1950 = vmatpush1.msra.mxu0 0.0
    %1951 = vmatprep.subr.mxu0 0.0
    %1952 = vmatpush1.msra.mxu0 0.0
    %1953 = vmatprep.subr.mxu0 0.0
    %1954 = vmatpush1.msra.mxu0 0.0
    %1955 = vmatprep.subr.mxu0 0.0
    %1956 = vmatpush1.msra.mxu0 0.0
    %1957 = vmatprep.subr.mxu0 0.0
    %1958 = vmatpush1.msra.mxu0 0.0
    %1959 = vmatprep.mubr.f32.mxu0 0.0
    %1960 = vmatmul.mubr.f32.gmra.mrb[0].mxu0 %v1893
    %v1961 = vpop.f32.mrb[0].mxu0
    %v1962 = vadd.f32 0.0, %v1961
    %v1963 = vpop.f32.mrb[0].mxu0
    %1964 = vdwg.mxu0
    %v1965 = vsel %vm1676, %v1650, 0
    %1967 = vmatprep.subr.mxu0 0.0
    %1968 = vmatpush1.msra.mxu0 %v1671
    %1969 = vmatprep.subr.mxu0 0.0
    %1970 = vmatpush1.msra.mxu0 %v1672
    %1971 = vmatprep.subr.mxu0 0.0
    %1972 = vmatpush1.msra.mxu0 %v1673
    %1973 = vmatprep.subr.mxu0 0.0
    %1974 = vmatpush1.msra.mxu0 %v1674
    %1975 = vmatprep.subr.mxu0 0.0
    %1976 = vmatpush1.msra.mxu0 %v1675
    %1977 = vmatprep.subr.mxu0 0.0
    %1978 = vmatpush1.msra.mxu0 0.0
    %1979 = vmatprep.subr.mxu0 0.0
    %1980 = vmatpush1.msra.mxu0 0.0
    %1981 = vmatprep.subr.mxu0 0.0
    %1982 = vmatpush1.msra.mxu0 0.0
    %1983 = vmatprep.subr.mxu0 0.0
    %1984 = vmatpush1.msra.mxu0 0.0
    %1985 = vmatprep.subr.mxu0 0.0
    %1986 = vmatpush1.msra.mxu0 0.0
    %1987 = vmatprep.subr.mxu0 0.0
    %1988 = vmatpush1.msra.mxu0 0.0
    %1989 = vmatprep.subr.mxu0 0.0
    %1990 = vmatpush1.msra.mxu0 0.0
    %1991 = vmatprep.subr.mxu0 0.0
    %1992 = vmatpush1.msra.mxu0 0.0
    %1993 = vmatprep.subr.mxu0 0.0
    %1994 = vmatpush1.msra.mxu0 0.0
    %1995 = vmatprep.subr.mxu0 0.0
    %1996 = vmatpush1.msra.mxu0 0.0
    %1997 = vmatprep.subr.mxu0 0.0
    %1998 = vmatpush1.msra.mxu0 0.0
    %1999 = vmatprep.subr.mxu0 0.0
    %2000 = vmatpush1.msra.mxu0 0.0
    %2001 = vmatprep.subr.mxu0 0.0
    %2002 = vmatpush1.msra.mxu0 0.0
    %2003 = vmatprep.subr.mxu0 0.0
    %2004 = vmatpush1.msra.mxu0 0.0
    %2005 = vmatprep.subr.mxu0 0.0
    %2006 = vmatpush1.msra.mxu0 0.0
    %2007 = vmatprep.subr.mxu0 0.0
    %2008 = vmatpush1.msra.mxu0 0.0
    %2009 = vmatprep.subr.mxu0 0.0
    %2010 = vmatpush1.msra.mxu0 0.0
    %2011 = vmatprep.subr.mxu0 0.0
    %2012 = vmatpush1.msra.mxu0 0.0
    %2013 = vmatprep.subr.mxu0 0.0
    %2014 = vmatpush1.msra.mxu0 0.0
    %2015 = vmatprep.subr.mxu0 0.0
    %2016 = vmatpush1.msra.mxu0 0.0
    %2017 = vmatprep.subr.mxu0 0.0
    %2018 = vmatpush1.msra.mxu0 0.0
    %2019 = vmatprep.subr.mxu0 0.0
    %2020 = vmatpush1.msra.mxu0 0.0
    %2021 = vmatprep.subr.mxu0 0.0
    %2022 = vmatpush1.msra.mxu0 0.0
    %2023 = vmatprep.subr.mxu0 0.0
    %2024 = vmatpush1.msra.mxu0 0.0
    %2025 = vmatprep.subr.mxu0 0.0
    %2026 = vmatpush1.msra.mxu0 0.0
    %2027 = vmatprep.subr.mxu0 0.0
    %2028 = vmatpush1.msra.mxu0 0.0
    %2029 = vmatprep.subr.mxu0 0.0
    %2030 = vmatpush1.msra.mxu0 0.0
    %2031 = vmatprep.mubr.f32.mxu0 0.0
    %2032 = vmatmul.mubr.f32.gmra.mrb[0].mxu0 %v1965
    %v2033 = vpop.f32.mrb[0].mxu0
    %v2034 = vadd.f32 0.0, %v2033
    %v2035 = vpop.f32.mrb[0].mxu0
    %2036 = vdwg.mxu0
    %vm2037 = vcmask 254976
    %v2038 = vsel %vm2037, %v1746, 0.0
    %v2039 = vsel %vm2037, %v1818, 0.0
    %v2040 = vadd.f32 %v2038, %v2039
    %v2041 = vsel %vm2037, %v1890, 0.0
    %v2042 = vadd.f32 %v2040, %v2041
    %v2043 = vsel %vm2037, %v1962, 0.0
    %v2044 = vadd.f32 %v2042, %v2043
    %v2045 = vsel %vm2037, %v2034, 0.0
    %v2046 = vadd.f32 %v2044, %v2045
    %2047 = vrot.lane.b32.xlu0 %v1561, 120
    %v2048 = vpop.permute.xlu0 %2047
    %v2050 = vadd.f32 %v2046, %v2048
    %v2051 = vtanh.pop %v2050
    %v2052 = vld [vmem:[%s6] sm:$0xff]
    %v2053 = vld [vmem:[%s6 + $0x8] sm:$0xff]
    %v2054 = vld [vmem:[%s6 + $0x10] sm:$0xff]
    %v2055 = vld [vmem:[%s6 + $0x18] sm:$0xff]
    %2056 = vrot.lane.b32.xlu0 %v1561, 88
    %v2057 = vpop.permute.xlu0 %2056
    %v2060 = vsel %vm1098, %v2051, 0
    %2062 = vmatprep.subr.mxu0 0.0
    %2063 = vmatpush1.msra.mxu0 %v2052
    %2064 = vmatprep.subr.mxu0 0.0
    %2065 = vmatpush1.msra.mxu0 %v2053
    %2066 = vmatprep.subr.mxu0 0.0
    %2067 = vmatpush1.msra.mxu0 %v2054
    %2068 = vmatprep.subr.mxu0 0.0
    %2069 = vmatpush1.msra.mxu0 %v2055
    %2070 = vmatprep.subr.mxu0 0.0
    %2071 = vmatpush1.msra.mxu0 0.0
    %2072 = vmatprep.subr.mxu0 0.0
    %2073 = vmatpush1.msra.mxu0 0.0
    %2074 = vmatprep.subr.mxu0 0.0
    %2075 = vmatpush1.msra.mxu0 0.0
    %2076 = vmatprep.subr.mxu0 0.0
    %2077 = vmatpush1.msra.mxu0 0.0
    %2078 = vmatprep.subr.mxu0 0.0
    %2079 = vmatpush1.msra.mxu0 0.0
    %2080 = vmatprep.subr.mxu0 0.0
    %2081 = vmatpush1.msra.mxu0 0.0
    %2082 = vmatprep.subr.mxu0 0.0
    %2083 = vmatpush1.msra.mxu0 0.0
    %2084 = vmatprep.subr.mxu0 0.0
    %2085 = vmatpush1.msra.mxu0 0.0
    %2086 = vmatprep.subr.mxu0 0.0
    %2087 = vmatpush1.msra.mxu0 0.0
    %2088 = vmatprep.subr.mxu0 0.0
    %2089 = vmatpush1.msra.mxu0 0.0
    %2090 = vmatprep.subr.mxu0 0.0
    %2091 = vmatpush1.msra.mxu0 0.0
    %2092 = vmatprep.subr.mxu0 0.0
    %2093 = vmatpush1.msra.mxu0 0.0
    %2094 = vmatprep.subr.mxu0 0.0
    %2095 = vmatpush1.msra.mxu0 0.0
    %2096 = vmatprep.subr.mxu0 0.0
    %2097 = vmatpush1.msra.mxu0 0.0
    %2098 = vmatprep.subr.mxu0 0.0
    %2099 = vmatpush1.msra.mxu0 0.0
    %2100 = vmatprep.subr.mxu0 0.0
    %2101 = vmatpush1.msra.mxu0 0.0
    %2102 = vmatprep.subr.mxu0 0.0
    %2103 = vmatpush1.msra.mxu0 0.0
    %2104 = vmatprep.subr.mxu0 0.0
    %2105 = vmatpush1.msra.mxu0 0.0
    %2106 = vmatprep.subr.mxu0 0.0
    %2107 = vmatpush1.msra.mxu0 0.0
    %2108 = vmatprep.subr.mxu0 0.0
    %2109 = vmatpush1.msra.mxu0 0.0
    %2110 = vmatprep.subr.mxu0 0.0
    %2111 = vmatpush1.msra.mxu0 0.0
    %2112 = vmatprep.subr.mxu0 0.0
    %2113 = vmatpush1.msra.mxu0 0.0
    %2114 = vmatprep.subr.mxu0 0.0
    %2115 = vmatpush1.msra.mxu0 0.0
    %2116 = vmatprep.subr.mxu0 0.0
    %2117 = vmatpush1.msra.mxu0 0.0
    %2118 = vmatprep.subr.mxu0 0.0
    %2119 = vmatpush1.msra.mxu0 0.0
    %2120 = vmatprep.subr.mxu0 0.0
    %2121 = vmatpush1.msra.mxu0 0.0
    %2122 = vmatprep.subr.mxu0 0.0
    %2123 = vmatpush1.msra.mxu0 0.0
    %2124 = vmatprep.subr.mxu0 0.0
    %2125 = vmatpush1.msra.mxu0 0.0
    %2126 = vmatprep.mubr.f32.mxu0 0.0
    %2127 = vmatmul.mubr.f32.gmra.mrb[0].mxu0 %v2060
    %v2128 = vpop.f32.mrb[0].mxu0
    %v2129 = vadd.f32 %v2057, %v2128
    %v2130 = vpop.f32.mrb[0].mxu0
    %2131 = vdwg.mxu0
    %vm2132 = vcmask 74752
    %2133 = vst.msk [vmem:[#allocation2] sm:$0x3] %vm2132, %v2129
    // Predicated region
    $region30: #{mlp_tagger_char_cnn_forward.1} parent=1 // pred_check
      _
    $region31: #{mlp_tagger_char_cnn_forward.1} parent=1 // pred_check_branch
      %2135 = sbr.rel (0) target = $region33
    $region32: #{mlp_tagger_char_cnn_forward.1} parent=1 // pred_region
      %s2137 = ssub.s32 32, 32
      %2138 = vsyncadd [#allocation3], %s2137
      %s2140 = sshll.u32 [#allocation2], 4
      %s2141 = int_to_ptr.vmem [resolvable:$true] %s2140
      %2143 = dma.vmem_to_hbm [thread:$0]  %s2141, 32, %s7, [#allocation3]
    $region33: #{mlp_tagger_char_cnn_forward.1} parent=1 // pred_fallthru
      _
    // Predicated region
    $region34: #{mlp_tagger_char_cnn_forward.1} parent=1 // pred_check
      _
    $region35: #{mlp_tagger_char_cnn_forward.1} parent=1 // pred_check_branch
      %2145 = sbr.rel (0) target = $region37
    $region36: #{mlp_tagger_char_cnn_forward.1} parent=1 // pred_region
      %2146 = dma.done [#allocation3], 32
    $region37: #{mlp_tagger_char_cnn_forward.1} parent=1 // pred_fallthru
      _
    %2147 = vsyncpa [#allocation3], 1

</llo_original>
